<compile_context>
chip_gen: v5e
topology: v5e:2x2
jax: 0.10.0
libtpu: 0.0.40
codegen_flags: <defaults>
</compile_context>

<pallas_src>
import functools

import numpy as np
import jax
import jax.numpy as jnp
from jax.experimental import pallas as pl
from jax.experimental.pallas import tpu as pltpu


# ---------------------------------------------------------------------------
# Kernel 1: voxelize + spatial hash for every level of one N-tile (lane-dense).
# ---------------------------------------------------------------------------
def hash_kernel(x_ref, bmin_ref, gsz_ref, hash_ref, *, n_levels, log2_table_size):
    x = x_ref[...]                       # (3, TN) f32, already clipped to the box
    bmin = bmin_ref[...]                 # (3, 1)
    gall = gsz_ref[...]                  # (3*L, 1) per-level grid sizes
    xb = x - bmin                        # (3, TN)

    tn = x.shape[1]
    # 8 voxel corners on the sublane axis: corner c -> ((c>>2)&1, (c>>1)&1, c&1)
    c = jax.lax.broadcasted_iota(jnp.int32, (8, tn), 0)
    dx = (c >> 2) & 1
    dy = (c >> 1) & 1
    dz = c & 1

    # primes = [1, 2654435761, 805459861]; int32 multiply wraps mod 2^32 (same
    # wrap-around behaviour as the torch implementation).
    p1 = jnp.int32(-1640531535)          # 2654435761 - 2^32
    p2 = jnp.int32(805459861)
    mask = jnp.int32((1 << log2_table_size) - 1)

    for l in range(n_levels):            # static unroll over the levels
        g = gall[3 * l:3 * l + 3, :]     # (3, 1) this level's grid size
        # exact divide kept for the floor so the selected voxel matches the
        # reference bit-for-bit (reciprocal could flip a cell at a boundary).
        bl = jnp.floor(xb / g).astype(jnp.int32)          # (3, TN) bottom-left cell
        h = ((bl[0:1, :] + dx)                            # * prime[0] == 1
             ^ ((bl[1:2, :] + dy) * p1)
             ^ ((bl[2:3, :] + dz) * p2)) & mask           # (8, TN)
        hash_ref[8 * l:8 * (l + 1), :] = h


# ---------------------------------------------------------------------------
# Kernel 2: trilinear interpolation of the 8 corner embeddings for every level.
# Trilinear weights are recomputed from x (cheap VPU work) instead of being
# round-tripped through HBM; since vmax - vmin == grid_size, the weight uses a
# host-precomputed reciprocal: w = (x - vmin) * (1 / grid_size).
# ---------------------------------------------------------------------------
def interp_kernel(x_ref, bmin_ref, gsz_ref, rgs_ref, emb_ref, out_ref, *, n_levels):
    x = x_ref[...]                       # (3, TN)
    bmin = bmin_ref[...]                 # (3, 1)
    gall = gsz_ref[...]                  # (3*L, 1)
    rall = rgs_ref[...]                  # (3*L, 1) host-precomputed reciprocals
    xb = x - bmin

    for l in range(n_levels):
        g = gall[3 * l:3 * l + 3, :]
        r = rall[3 * l:3 * l + 3, :]
        blf = jnp.floor(xb / g)                           # same floor as hash kernel
        w = (xb - blf * g) * r                            # (3, TN) trilinear weights
        wx, wy, wz = w[0:1, :], w[1:2, :], w[2:3, :]
        omx, omy, omz = 1.0 - wx, 1.0 - wy, 1.0 - wz

        e = emb_ref[16 * l:16 * (l + 1), :]               # (16, TN): row = f*8 + corner
        for f in range(2):
            ef = e[8 * f:8 * (f + 1), :]                  # (8, TN) corners 0..7
            cx = ef[0:4, :] * omx + ef[4:8, :] * wx       # (4, TN)
            cy = cx[0:2, :] * omy + cx[2:4, :] * wy       # (2, TN)
            cz = cy[0:1, :] * omz + cy[1:2, :] * wz       # (1, TN)
            out_ref[2 * l + f:2 * l + f + 1, :] = cz      # lane-dense row store


# ---------------------------------------------------------------------------
# Parameter-setup glue
# ---------------------------------------------------------------------------
def level_grid_sizes(box_min, box_max, n_levels, coarsest, finest):
    b = jnp.exp((jnp.log(jnp.float32(finest)) - jnp.log(jnp.float32(coarsest)))
                / (n_levels - 1))
    levels = jnp.arange(n_levels, dtype=jnp.float32)
    resolutions = jnp.floor(jnp.float32(coarsest) * (b ** levels))      # (L,)
    return (box_max - box_min)[None, :] / resolutions[:, None]          # (L, 3)


def ingp_hash_encode(x, box_min, box_max, tables, coarsest, finest,
                     log2_table_size, tile_n=512):
    """x: (N, 3) f32 -> (N, n_levels * n_features) f32 (== torch.cat over levels)."""
    N = x.shape[0]
    L, T, F = tables.shape
    assert F == 2, "kernels specialized for n_feature_per_level == 2"
    assert tile_n % 128 == 0

    n_tiles = -(-N // tile_n)        # use tile_n in [1024, 4096] for very large N
    n_pad = n_tiles * tile_n

    gsz = level_grid_sizes(box_min, box_max, L, coarsest, finest).astype(jnp.float32)
    gsz_col = gsz.reshape(L * 3, 1)
    rgs_col = (1.0 / gsz).reshape(L * 3, 1)
    bmin_col = box_min.reshape(3, 1).astype(jnp.float32)
    bmax_col = box_max.reshape(3, 1).astype(jnp.float32)

    # clamp once in the wrapper (torch.clamp), transpose to lane-dense (3, Np), pad.
    xt = jnp.pad(x.astype(jnp.float32).T, ((0, 0), (0, n_pad - N)))
    xt = jnp.clip(xt, bmin_col, bmax_col)

    hashed = pl.pallas_call(
        functools.partial(hash_kernel, n_levels=L, log2_table_size=log2_table_size),
        out_shape=jax.ShapeDtypeStruct((L * 8, n_pad), jnp.int32),
        grid=(n_tiles,),
        in_specs=[
            pl.BlockSpec((3, tile_n), lambda n: (0, n)),       # x tile
            pl.BlockSpec((3, 1), lambda n: (0, 0)),            # box_min column
            pl.BlockSpec((L * 3, 1), lambda n: (0, 0)),        # per-level grid sizes
        ],
        out_specs=pl.BlockSpec((L * 8, tile_n), lambda n: (0, n)),
        compiler_params=pltpu.CompilerParams(dimension_semantics=("parallel",)),
    )(xt, bmin_col, gsz_col)

    # TODO(synk): the nn.Embedding lookup is a data-dependent gather over a
    # 2^log2_table_size table; it stays as an XLA gather between the two Pallas
    # kernels (an in-kernel VMEM-resident-table gather has no robust Mosaic
    # lowering for tables this large).  Tables are pre-transposed to (L, F, T) so
    # the gather result is already lane-dense (feature/corner on sublanes, N on
    # lanes) -- in a real model the parameters would be stored in this layout.
    tables_t = tables.astype(jnp.float32).transpose(0, 2, 1)      # (L, F, T)
    hashed3 = hashed.reshape(L, 8, n_pad)
    emb = jax.vmap(lambda t, h: t[:, h])(tables_t, hashed3)       # (L, F, 8, Np)
    emb = emb.reshape(L * 16, n_pad)                              # row = l*16 + f*8 + c

    out_t = pl.pallas_call(
        functools.partial(interp_kernel, n_levels=L),
        out_shape=jax.ShapeDtypeStruct((L * F, n_pad), jnp.float32),
        grid=(n_tiles,),
        in_specs=[
            pl.BlockSpec((3, tile_n), lambda n: (0, n)),         # x tile
            pl.BlockSpec((3, 1), lambda n: (0, 0)),              # box_min column
            pl.BlockSpec((L * 3, 1), lambda n: (0, 0)),          # grid sizes
            pl.BlockSpec((L * 3, 1), lambda n: (0, 0)),          # reciprocals
            pl.BlockSpec((L * 16, tile_n), lambda n: (0, n)),    # gathered embeddings
        ],
        out_specs=pl.BlockSpec((L * F, tile_n), lambda n: (0, n)),
        compiler_params=pltpu.CompilerParams(dimension_semantics=("parallel",)),
    )(xt, bmin_col, gsz_col, rgs_col, emb)

    # (L*F, Np) -> (N, L*F); column order level-major / feature-minor matches
    # torch.cat([level_0, level_1, ...], dim=-1).  This final small transpose is
    # the only remaining layout op outside the kernels (output stores themselves
    # are lane-dense).
    return out_t[:, :N].T


# ---------------------------------------------------------------------------
# Pure-JAX reference mirroring the PyTorch forward (for verification)
# ---------------------------------------------------------------------------
def reference_forward(x, box_min, box_max, tables, coarsest, finest, log2_table_size):
    L, _, _ = tables.shape
    grid_sizes = level_grid_sizes(box_min, box_max, L, coarsest, finest)
    mask = jnp.int32((1 << log2_table_size) - 1)
    box_offsets = jnp.array([[i, j, k] for i in (0, 1) for j in (0, 1) for k in (0, 1)],
                            dtype=jnp.int32)                       # (8, 3)
    xc = jnp.clip(x, box_min, box_max)
    outs = []
    for i in range(L):
        gs = grid_sizes[i]
        bl = jnp.floor((xc - box_min) / gs).astype(jnp.int32)
        vmin = bl.astype(jnp.float32) * gs + box_min
        vmax = vmin + gs
        vi = bl[:, None, :] + box_offsets[None, :, :]              # (N, 8, 3)
        h = (vi[..., 0]
             ^ (vi[..., 1] * jnp.int32(-1640531535))
             ^ (vi[..., 2] * jnp.int32(805459861))) & mask
        ve = tables[i][h]                                          # (N, 8, 2)
        w = (xc - vmin) / (vmax - vmin)
        wx, wy, wz = w[:, 0:1], w[:, 1:2], w[:, 2:3]
        c00 = ve[:, 0] * (1 - wx) + ve[:, 4] * wx
        c01 = ve[:, 1] * (1 - wx) + ve[:, 5] * wx
        c10 = ve[:, 2] * (1 - wx) + ve[:, 6] * wx
        c11 = ve[:, 3] * (1 - wx) + ve[:, 7] * wx
        c0 = c00 * (1 - wy) + c10 * wy
        c1 = c01 * (1 - wy) + c11 * wy
        outs.append(c0 * (1 - wz) + c1 * wz)
    return jnp.concatenate(outs, axis=-1)


if __name__ == "__main__":
    key = jax.random.PRNGKey(0)
    k_x, k_tbl = jax.random.split(key)

    # Small demo config (table kept small; exercises N-padding and 4 grid tiles).
    N = 2000
    n_levels = 16
    n_feat = 2
    log2_table_size = 14
    coarsest, finest = 16, 512
    TILE_N = 512

    box_min = jnp.array([-1.0, -1.0, -1.0], jnp.float32)
    box_max = jnp.array([1.0, 1.0, 1.0], jnp.float32)

    x = jax.random.uniform(k_x, (N, 3), jnp.float32, minval=-1.0, maxval=1.0)
    # nn.init.uniform_(weight, a=-1e-4, b=1e-4) for each of n_levels embedding tables
    tables = jax.random.uniform(k_tbl, (n_levels, 2 ** log2_table_size, n_feat),
                                jnp.float32, minval=-1e-4, maxval=1e-4)

    out = ingp_hash_encode(x, box_min, box_max, tables,
                           coarsest, finest, log2_table_size, tile_n=TILE_N)
    out = jax.block_until_ready(out)

    ref = reference_forward(x, box_min, box_max, tables,
                            coarsest, finest, log2_table_size)

    assert out.shape == (N, n_levels * n_feat)
    # Voxel selection (floor) matches the reference exactly; the tiny tolerance
    # covers ulp-level differences from the reciprocal-based weight computation.
    np.testing.assert_allclose(np.asarray(out), np.asarray(ref), rtol=1e-4, atol=1e-6)
    print("KERNEL_OK")
</pallas_src>

<mosaic_0001>
module attributes {stable_mosaic.version = 11 : i64} {
  func.func @hash_kernel(%arg0: i32, %arg1: memref<3x512xf32, #tpu.memory_space<vmem>>, %arg2: memref<3x1xf32, #tpu.memory_space<vmem>>, %arg3: memref<48x1xf32, #tpu.memory_space<vmem>>, %arg4: memref<128x512xi32, #tpu.memory_space<vmem>>) attributes {dimension_semantics = [#tpu.dimension_semantics<parallel>], iteration_bounds = array<i64: 4>, scalar_prefetch = 0 : i64, scratch_operands = 0 : i64, tpu.core_type = #tpu.core_type<tc>, window_params = [{transform_indices = @transform_0, window_bounds = array<i64: 3, 512>}, {pipeline_mode = #tpu.pipeline_mode<synchronous>, transform_indices = @transform_1, window_bounds = array<i64: 3, 1>}, {pipeline_mode = #tpu.pipeline_mode<synchronous>, transform_indices = @transform_2, window_bounds = array<i64: 48, 1>}, {transform_indices = @transform_3, window_bounds = array<i64: 128, 512>}]} {
    %c0 = arith.constant 0 : index
    %c0_0 = arith.constant 0 : index
    %0 = vector.load %arg1[%c0, %c0_0] : memref<3x512xf32, #tpu.memory_space<vmem>>, vector<3x512xf32>
    %c0_1 = arith.constant 0 : index
    %c0_2 = arith.constant 0 : index
    %1 = vector.load %arg2[%c0_1, %c0_2] : memref<3x1xf32, #tpu.memory_space<vmem>>, vector<3x1xf32>
    %c0_3 = arith.constant 0 : index
    %c0_4 = arith.constant 0 : index
    %2 = vector.load %arg3[%c0_3, %c0_4] : memref<48x1xf32, #tpu.memory_space<vmem>>, vector<48x1xf32>
    %3 = vector.broadcast %1 : vector<3x1xf32> to vector<3x512xf32>
    %4 = arith.subf %0, %3 : vector<3x512xf32>
    %5 = tpu.iota {dimensions = array<i32: 0>} : vector<8x512xi32>
    %c2_i32 = arith.constant 2 : i32
    %6 = vector.broadcast %c2_i32 : i32 to vector<8x512xi32>
    %7 = arith.shrsi %5, %6 : vector<8x512xi32>
    %c1_i32 = arith.constant 1 : i32
    %8 = vector.broadcast %c1_i32 : i32 to vector<8x512xi32>
    %9 = arith.andi %7, %8 : vector<8x512xi32>
    %c1_i32_5 = arith.constant 1 : i32
    %10 = vector.broadcast %c1_i32_5 : i32 to vector<8x512xi32>
    %11 = arith.shrsi %5, %10 : vector<8x512xi32>
    %c1_i32_6 = arith.constant 1 : i32
    %12 = vector.broadcast %c1_i32_6 : i32 to vector<8x512xi32>
    %13 = arith.andi %11, %12 : vector<8x512xi32>
    %c1_i32_7 = arith.constant 1 : i32
    %14 = vector.broadcast %c1_i32_7 : i32 to vector<8x512xi32>
    %15 = arith.andi %5, %14 : vector<8x512xi32>
    %16 = vector.extract_strided_slice %2 {offsets = [0, 0], sizes = [3, 1], strides = [1, 1]} : vector<48x1xf32> to vector<3x1xf32>
    %17 = vector.broadcast %16 : vector<3x1xf32> to vector<3x512xf32>
    %18 = arith.divf %4, %17 : vector<3x512xf32>
    %19 = math.floor %18 : vector<3x512xf32>
    %20 = arith.fptosi %19 : vector<3x512xf32> to vector<3x512xi32>
    %21 = vector.extract_strided_slice %20 {offsets = [0, 0], sizes = [1, 512], strides = [1, 1]} : vector<3x512xi32> to vector<1x512xi32>
    %22 = vector.broadcast %21 : vector<1x512xi32> to vector<8x512xi32>
    %23 = arith.addi %22, %9 : vector<8x512xi32>
    %24 = vector.extract_strided_slice %20 {offsets = [1, 0], sizes = [1, 512], strides = [1, 1]} : vector<3x512xi32> to vector<1x512xi32>
    %25 = vector.broadcast %24 : vector<1x512xi32> to vector<8x512xi32>
    %26 = arith.addi %25, %13 : vector<8x512xi32>
    %c-1640531535_i32 = arith.constant -1640531535 : i32
    %27 = vector.broadcast %c-1640531535_i32 : i32 to vector<8x512xi32>
    %28 = arith.muli %26, %27 : vector<8x512xi32>
    %29 = arith.xori %23, %28 : vector<8x512xi32>
    %30 = vector.extract_strided_slice %20 {offsets = [2, 0], sizes = [1, 512], strides = [1, 1]} : vector<3x512xi32> to vector<1x512xi32>
    %31 = vector.broadcast %30 : vector<1x512xi32> to vector<8x512xi32>
    %32 = arith.addi %31, %15 : vector<8x512xi32>
    %c805459861_i32 = arith.constant 805459861 : i32
    %33 = vector.broadcast %c805459861_i32 : i32 to vector<8x512xi32>
    %34 = arith.muli %32, %33 : vector<8x512xi32>
    %35 = arith.xori %29, %34 : vector<8x512xi32>
    %c16383_i32 = arith.constant 16383 : i32
    %36 = vector.broadcast %c16383_i32 : i32 to vector<8x512xi32>
    %37 = arith.andi %35, %36 : vector<8x512xi32>
    %c0_8 = arith.constant 0 : index
    %c0_9 = arith.constant 0 : index
    %38 = vector.load %arg4[%c0_8, %c0_9] : memref<128x512xi32, #tpu.memory_space<vmem>>, vector<8x512xi32>
    tpu.vector_store %arg4[%c0_8, %c0_9], %37 {strides = array<i32>} : memref<128x512xi32, #tpu.memory_space<vmem>>, vector<8x512xi32>,
    %39 = vector.extract_strided_slice %2 {offsets = [3, 0], sizes = [3, 1], strides = [1, 1]} : vector<48x1xf32> to vector<3x1xf32>
    %40 = vector.broadcast %39 : vector<3x1xf32> to vector<3x512xf32>
    %41 = arith.divf %4, %40 : vector<3x512xf32>
    %42 = math.floor %41 : vector<3x512xf32>
    %43 = arith.fptosi %42 : vector<3x512xf32> to vector<3x512xi32>
    %44 = vector.extract_strided_slice %43 {offsets = [0, 0], sizes = [1, 512], strides = [1, 1]} : vector<3x512xi32> to vector<1x512xi32>
    %45 = vector.broadcast %44 : vector<1x512xi32> to vector<8x512xi32>
    %46 = arith.addi %45, %9 : vector<8x512xi32>
    %47 = vector.extract_strided_slice %43 {offsets = [1, 0], sizes = [1, 512], strides = [1, 1]} : vector<3x512xi32> to vector<1x512xi32>
    %48 = vector.broadcast %47 : vector<1x512xi32> to vector<8x512xi32>
    %49 = arith.addi %48, %13 : vector<8x512xi32>
    %c-1640531535_i32_10 = arith.constant -1640531535 : i32
    %50 = vector.broadcast %c-1640531535_i32_10 : i32 to vector<8x512xi32>
    %51 = arith.muli %49, %50 : vector<8x512xi32>
    %52 = arith.xori %46, %51 : vector<8x512xi32>
    %53 = vector.extract_strided_slice %43 {offsets = [2, 0], sizes = [1, 512], strides = [1, 1]} : vector<3x512xi32> to vector<1x512xi32>
    %54 = vector.broadcast %53 : vector<1x512xi32> to vector<8x512xi32>
    %55 = arith.addi %54, %15 : vector<8x512xi32>
    %c805459861_i32_11 = arith.constant 805459861 : i32
    %56 = vector.broadcast %c805459861_i32_11 : i32 to vector<8x512xi32>
    %57 = arith.muli %55, %56 : vector<8x512xi32>
    %58 = arith.xori %52, %57 : vector<8x512xi32>
    %c16383_i32_12 = arith.constant 16383 : i32
    %59 = vector.broadcast %c16383_i32_12 : i32 to vector<8x512xi32>
    %60 = arith.andi %58, %59 : vector<8x512xi32>
    %c8 = arith.constant 8 : index
    %c0_13 = arith.constant 0 : index
    %61 = vector.load %arg4[%c8, %c0_13] : memref<128x512xi32, #tpu.memory_space<vmem>>, vector<8x512xi32>
    tpu.vector_store %arg4[%c8, %c0_13], %60 {strides = array<i32>} : memref<128x512xi32, #tpu.memory_space<vmem>>, vector<8x512xi32>,
    %62 = vector.extract_strided_slice %2 {offsets = [6, 0], sizes = [3, 1], strides = [1, 1]} : vector<48x1xf32> to vector<3x1xf32>
    %63 = vector.broadcast %62 : vector<3x1xf32> to vector<3x512xf32>
    %64 = arith.divf %4, %63 : vector<3x512xf32>
    %65 = math.floor %64 : vector<3x512xf32>
    %66 = arith.fptosi %65 : vector<3x512xf32> to vector<3x512xi32>
    %67 = vector.extract_strided_slice %66 {offsets = [0, 0], sizes = [1, 512], strides = [1, 1]} : vector<3x512xi32> to vector<1x512xi32>
    %68 = vector.broadcast %67 : vector<1x512xi32> to vector<8x512xi32>
    %69 = arith.addi %68, %9 : vector<8x512xi32>
    %70 = vector.extract_strided_slice %66 {offsets = [1, 0], sizes = [1, 512], strides = [1, 1]} : vector<3x512xi32> to vector<1x512xi32>
    %71 = vector.broadcast %70 : vector<1x512xi32> to vector<8x512xi32>
    %72 = arith.addi %71, %13 : vector<8x512xi32>
    %c-1640531535_i32_14 = arith.constant -1640531535 : i32
    %73 = vector.broadcast %c-1640531535_i32_14 : i32 to vector<8x512xi32>
    %74 = arith.muli %72, %73 : vector<8x512xi32>
    %75 = arith.xori %69, %74 : vector<8x512xi32>
    %76 = vector.extract_strided_slice %66 {offsets = [2, 0], sizes = [1, 512], strides = [1, 1]} : vector<3x512xi32> to vector<1x512xi32>
    %77 = vector.broadcast %76 : vector<1x512xi32> to vector<8x512xi32>
    %78 = arith.addi %77, %15 : vector<8x512xi32>
    %c805459861_i32_15 = arith.constant 805459861 : i32
    %79 = vector.broadcast %c805459861_i32_15 : i32 to vector<8x512xi32>
    %80 = arith.muli %78, %79 : vector<8x512xi32>
    %81 = arith.xori %75, %80 : vector<8x512xi32>
    %c16383_i32_16 = arith.constant 16383 : i32
    %82 = vector.broadcast %c16383_i32_16 : i32 to vector<8x512xi32>
    %83 = arith.andi %81, %82 : vector<8x512xi32>
    %c16 = arith.constant 16 : index
    %c0_17 = arith.constant 0 : index
    %84 = vector.load %arg4[%c16, %c0_17] : memref<128x512xi32, #tpu.memory_space<vmem>>, vector<8x512xi32>
    tpu.vector_store %arg4[%c16, %c0_17], %83 {strides = array<i32>} : memref<128x512xi32, #tpu.memory_space<vmem>>, vector<8x512xi32>,
    %85 = vector.extract_strided_slice %2 {offsets = [9, 0], sizes = [3, 1], strides = [1, 1]} : vector<48x1xf32> to vector<3x1xf32>
    %86 = vector.broadcast %85 : vector<3x1xf32> to vector<3x512xf32>
    %87 = arith.divf %4, %86 : vector<3x512xf32>
    %88 = math.floor %87 : vector<3x512xf32>
    %89 = arith.fptosi %88 : vector<3x512xf32> to vector<3x512xi32>
    %90 = vector.extract_strided_slice %89 {offsets = [0, 0], sizes = [1, 512], strides = [1, 1]} : vector<3x512xi32> to vector<1x512xi32>
    %91 = vector.broadcast %90 : vector<1x512xi32> to vector<8x512xi32>
    %92 = arith.addi %91, %9 : vector<8x512xi32>
    %93 = vector.extract_strided_slice %89 {offsets = [1, 0], sizes = [1, 512], strides = [1, 1]} : vector<3x512xi32> to vector<1x512xi32>
    %94 = vector.broadcast %93 : vector<1x512xi32> to vector<8x512xi32>
    %95 = arith.addi %94, %13 : vector<8x512xi32>
    %c-1640531535_i32_18 = arith.constant -1640531535 : i32
    %96 = vector.broadcast %c-1640531535_i32_18 : i32 to vector<8x512xi32>
    %97 = arith.muli %95, %96 : vector<8x512xi32>
    %98 = arith.xori %92, %97 : vector<8x512xi32>
    %99 = vector.extract_strided_slice %89 {offsets = [2, 0], sizes = [1, 512], strides = [1, 1]} : vector<3x512xi32> to vector<1x512xi32>
    %100 = vector.broadcast %99 : vector<1x512xi32> to vector<8x512xi32>
    %101 = arith.addi %100, %15 : vector<8x512xi32>
    %c805459861_i32_19 = arith.constant 805459861 : i32
    %102 = vector.broadcast %c805459861_i32_19 : i32 to vector<8x512xi32>
    %103 = arith.muli %101, %102 : vector<8x512xi32>
    %104 = arith.xori %98, %103 : vector<8x512xi32>
    %c16383_i32_20 = arith.constant 16383 : i32
    %105 = vector.broadcast %c16383_i32_20 : i32 to vector<8x512xi32>
    %106 = arith.andi %104, %105 : vector<8x512xi32>
    %c24 = arith.constant 24 : index
    %c0_21 = arith.constant 0 : index
    %107 = vector.load %arg4[%c24, %c0_21] : memref<128x512xi32, #tpu.memory_space<vmem>>, vector<8x512xi32>
    tpu.vector_store %arg4[%c24, %c0_21], %106 {strides = array<i32>} : memref<128x512xi32, #tpu.memory_space<vmem>>, vector<8x512xi32>,
    %108 = vector.extract_strided_slice %2 {offsets = [12, 0], sizes = [3, 1], strides = [1, 1]} : vector<48x1xf32> to vector<3x1xf32>
    %109 = vector.broadcast %108 : vector<3x1xf32> to vector<3x512xf32>
    %110 = arith.divf %4, %109 : vector<3x512xf32>
    %111 = math.floor %110 : vector<3x512xf32>
    %112 = arith.fptosi %111 : vector<3x512xf32> to vector<3x512xi32>
    %113 = vector.extract_strided_slice %112 {offsets = [0, 0], sizes = [1, 512], strides = [1, 1]} : vector<3x512xi32> to vector<1x512xi32>
    %114 = vector.broadcast %113 : vector<1x512xi32> to vector<8x512xi32>
    %115 = arith.addi %114, %9 : vector<8x512xi32>
    %116 = vector.extract_strided_slice %112 {offsets = [1, 0], sizes = [1, 512], strides = [1, 1]} : vector<3x512xi32> to vector<1x512xi32>
    %117 = vector.broadcast %116 : vector<1x512xi32> to vector<8x512xi32>
    %118 = arith.addi %117, %13 : vector<8x512xi32>
    %c-1640531535_i32_22 = arith.constant -1640531535 : i32
    %119 = vector.broadcast %c-1640531535_i32_22 : i32 to vector<8x512xi32>
    %120 = arith.muli %118, %119 : vector<8x512xi32>
    %121 = arith.xori %115, %120 : vector<8x512xi32>
    %122 = vector.extract_strided_slice %112 {offsets = [2, 0], sizes = [1, 512], strides = [1, 1]} : vector<3x512xi32> to vector<1x512xi32>
    %123 = vector.broadcast %122 : vector<1x512xi32> to vector<8x512xi32>
    %124 = arith.addi %123, %15 : vector<8x512xi32>
    %c805459861_i32_23 = arith.constant 805459861 : i32
    %125 = vector.broadcast %c805459861_i32_23 : i32 to vector<8x512xi32>
    %126 = arith.muli %124, %125 : vector<8x512xi32>
    %127 = arith.xori %121, %126 : vector<8x512xi32>
    %c16383_i32_24 = arith.constant 16383 : i32
    %128 = vector.broadcast %c16383_i32_24 : i32 to vector<8x512xi32>
    %129 = arith.andi %127, %128 : vector<8x512xi32>
    %c32 = arith.constant 32 : index
    %c0_25 = arith.constant 0 : index
    %130 = vector.load %arg4[%c32, %c0_25] : memref<128x512xi32, #tpu.memory_space<vmem>>, vector<8x512xi32>
    tpu.vector_store %arg4[%c32, %c0_25], %129 {strides = array<i32>} : memref<128x512xi32, #tpu.memory_space<vmem>>, vector<8x512xi32>,
    %131 = vector.extract_strided_slice %2 {offsets = [15, 0], sizes = [3, 1], strides = [1, 1]} : vector<48x1xf32> to vector<3x1xf32>
    %132 = vector.broadcast %131 : vector<3x1xf32> to vector<3x512xf32>
    %133 = arith.divf %4, %132 : vector<3x512xf32>
    %134 = math.floor %133 : vector<3x512xf32>
    %135 = arith.fptosi %134 : vector<3x512xf32> to vector<3x512xi32>
    %136 = vector.extract_strided_slice %135 {offsets = [0, 0], sizes = [1, 512], strides = [1, 1]} : vector<3x512xi32> to vector<1x512xi32>
    %137 = vector.broadcast %136 : vector<1x512xi32> to vector<8x512xi32>
    %138 = arith.addi %137, %9 : vector<8x512xi32>
    %139 = vector.extract_strided_slice %135 {offsets = [1, 0], sizes = [1, 512], strides = [1, 1]} : vector<3x512xi32> to vector<1x512xi32>
    %140 = vector.broadcast %139 : vector<1x512xi32> to vector<8x512xi32>
    %141 = arith.addi %140, %13 : vector<8x512xi32>
    %c-1640531535_i32_26 = arith.constant -1640531535 : i32
    %142 = vector.broadcast %c-1640531535_i32_26 : i32 to vector<8x512xi32>
    %143 = arith.muli %141, %142 : vector<8x512xi32>
    %144 = arith.xori %138, %143 : vector<8x512xi32>
    %145 = vector.extract_strided_slice %135 {offsets = [2, 0], sizes = [1, 512], strides = [1, 1]} : vector<3x512xi32> to vector<1x512xi32>
    %146 = vector.broadcast %145 : vector<1x512xi32> to vector<8x512xi32>
    %147 = arith.addi %146, %15 : vector<8x512xi32>
    %c805459861_i32_27 = arith.constant 805459861 : i32
    %148 = vector.broadcast %c805459861_i32_27 : i32 to vector<8x512xi32>
    %149 = arith.muli %147, %148 : vector<8x512xi32>
    %150 = arith.xori %144, %149 : vector<8x512xi32>
    %c16383_i32_28 = arith.constant 16383 : i32
    %151 = vector.broadcast %c16383_i32_28 : i32 to vector<8x512xi32>
    %152 = arith.andi %150, %151 : vector<8x512xi32>
    %c40 = arith.constant 40 : index
    %c0_29 = arith.constant 0 : index
    %153 = vector.load %arg4[%c40, %c0_29] : memref<128x512xi32, #tpu.memory_space<vmem>>, vector<8x512xi32>
    tpu.vector_store %arg4[%c40, %c0_29], %152 {strides = array<i32>} : memref<128x512xi32, #tpu.memory_space<vmem>>, vector<8x512xi32>,
    %154 = vector.extract_strided_slice %2 {offsets = [18, 0], sizes = [3, 1], strides = [1, 1]} : vector<48x1xf32> to vector<3x1xf32>
    %155 = vector.broadcast %154 : vector<3x1xf32> to vector<3x512xf32>
    %156 = arith.divf %4, %155 : vector<3x512xf32>
    %157 = math.floor %156 : vector<3x512xf32>
    %158 = arith.fptosi %157 : vector<3x512xf32> to vector<3x512xi32>
    %159 = vector.extract_strided_slice %158 {offsets = [0, 0], sizes = [1, 512], strides = [1, 1]} : vector<3x512xi32> to vector<1x512xi32>
    %160 = vector.broadcast %159 : vector<1x512xi32> to vector<8x512xi32>
    %161 = arith.addi %160, %9 : vector<8x512xi32>
    %162 = vector.extract_strided_slice %158 {offsets = [1, 0], sizes = [1, 512], strides = [1, 1]} : vector<3x512xi32> to vector<1x512xi32>
    %163 = vector.broadcast %162 : vector<1x512xi32> to vector<8x512xi32>
    %164 = arith.addi %163, %13 : vector<8x512xi32>
    %c-1640531535_i32_30 = arith.constant -1640531535 : i32
    %165 = vector.broadcast %c-1640531535_i32_30 : i32 to vector<8x512xi32>
    %166 = arith.muli %164, %165 : vector<8x512xi32>
    %167 = arith.xori %161, %166 : vector<8x512xi32>
    %168 = vector.extract_strided_slice %158 {offsets = [2, 0], sizes = [1, 512], strides = [1, 1]} : vector<3x512xi32> to vector<1x512xi32>
    %169 = vector.broadcast %168 : vector<1x512xi32> to vector<8x512xi32>
    %170 = arith.addi %169, %15 : vector<8x512xi32>
    %c805459861_i32_31 = arith.constant 805459861 : i32
    %171 = vector.broadcast %c805459861_i32_31 : i32 to vector<8x512xi32>
    %172 = arith.muli %170, %171 : vector<8x512xi32>
    %173 = arith.xori %167, %172 : vector<8x512xi32>
    %c16383_i32_32 = arith.constant 16383 : i32
    %174 = vector.broadcast %c16383_i32_32 : i32 to vector<8x512xi32>
    %175 = arith.andi %173, %174 : vector<8x512xi32>
    %c48 = arith.constant 48 : index
    %c0_33 = arith.constant 0 : index
    %176 = vector.load %arg4[%c48, %c0_33] : memref<128x512xi32, #tpu.memory_space<vmem>>, vector<8x512xi32>
    tpu.vector_store %arg4[%c48, %c0_33], %175 {strides = array<i32>} : memref<128x512xi32, #tpu.memory_space<vmem>>, vector<8x512xi32>,
    %177 = vector.extract_strided_slice %2 {offsets = [21, 0], sizes = [3, 1], strides = [1, 1]} : vector<48x1xf32> to vector<3x1xf32>
    %178 = vector.broadcast %177 : vector<3x1xf32> to vector<3x512xf32>
    %179 = arith.divf %4, %178 : vector<3x512xf32>
    %180 = math.floor %179 : vector<3x512xf32>
    %181 = arith.fptosi %180 : vector<3x512xf32> to vector<3x512xi32>
    %182 = vector.extract_strided_slice %181 {offsets = [0, 0], sizes = [1, 512], strides = [1, 1]} : vector<3x512xi32> to vector<1x512xi32>
    %183 = vector.broadcast %182 : vector<1x512xi32> to vector<8x512xi32>
    %184 = arith.addi %183, %9 : vector<8x512xi32>
    %185 = vector.extract_strided_slice %181 {offsets = [1, 0], sizes = [1, 512], strides = [1, 1]} : vector<3x512xi32> to vector<1x512xi32>
    %186 = vector.broadcast %185 : vector<1x512xi32> to vector<8x512xi32>
    %187 = arith.addi %186, %13 : vector<8x512xi32>
    %c-1640531535_i32_34 = arith.constant -1640531535 : i32
    %188 = vector.broadcast %c-1640531535_i32_34 : i32 to vector<8x512xi32>
    %189 = arith.muli %187, %188 : vector<8x512xi32>
    %190 = arith.xori %184, %189 : vector<8x512xi32>
    %191 = vector.extract_strided_slice %181 {offsets = [2, 0], sizes = [1, 512], strides = [1, 1]} : vector<3x512xi32> to vector<1x512xi32>
    %192 = vector.broadcast %191 : vector<1x512xi32> to vector<8x512xi32>
    %193 = arith.addi %192, %15 : vector<8x512xi32>
    %c805459861_i32_35 = arith.constant 805459861 : i32
    %194 = vector.broadcast %c805459861_i32_35 : i32 to vector<8x512xi32>
    %195 = arith.muli %193, %194 : vector<8x512xi32>
    %196 = arith.xori %190, %195 : vector<8x512xi32>
    %c16383_i32_36 = arith.constant 16383 : i32
    %197 = vector.broadcast %c16383_i32_36 : i32 to vector<8x512xi32>
    %198 = arith.andi %196, %197 : vector<8x512xi32>
    %c56 = arith.constant 56 : index
    %c0_37 = arith.constant 0 : index
    %199 = vector.load %arg4[%c56, %c0_37] : memref<128x512xi32, #tpu.memory_space<vmem>>, vector<8x512xi32>
    tpu.vector_store %arg4[%c56, %c0_37], %198 {strides = array<i32>} : memref<128x512xi32, #tpu.memory_space<vmem>>, vector<8x512xi32>,
    %200 = vector.extract_strided_slice %2 {offsets = [24, 0], sizes = [3, 1], strides = [1, 1]} : vector<48x1xf32> to vector<3x1xf32>
    %201 = vector.broadcast %200 : vector<3x1xf32> to vector<3x512xf32>
    %202 = arith.divf %4, %201 : vector<3x512xf32>
    %203 = math.floor %202 : vector<3x512xf32>
    %204 = arith.fptosi %203 : vector<3x512xf32> to vector<3x512xi32>
    %205 = vector.extract_strided_slice %204 {offsets = [0, 0], sizes = [1, 512], strides = [1, 1]} : vector<3x512xi32> to vector<1x512xi32>
    %206 = vector.broadcast %205 : vector<1x512xi32> to vector<8x512xi32>
    %207 = arith.addi %206, %9 : vector<8x512xi32>
    %208 = vector.extract_strided_slice %204 {offsets = [1, 0], sizes = [1, 512], strides = [1, 1]} : vector<3x512xi32> to vector<1x512xi32>
    %209 = vector.broadcast %208 : vector<1x512xi32> to vector<8x512xi32>
    %210 = arith.addi %209, %13 : vector<8x512xi32>
    %c-1640531535_i32_38 = arith.constant -1640531535 : i32
    %211 = vector.broadcast %c-1640531535_i32_38 : i32 to vector<8x512xi32>
    %212 = arith.muli %210, %211 : vector<8x512xi32>
    %213 = arith.xori %207, %212 : vector<8x512xi32>
    %214 = vector.extract_strided_slice %204 {offsets = [2, 0], sizes = [1, 512], strides = [1, 1]} : vector<3x512xi32> to vector<1x512xi32>
    %215 = vector.broadcast %214 : vector<1x512xi32> to vector<8x512xi32>
    %216 = arith.addi %215, %15 : vector<8x512xi32>
    %c805459861_i32_39 = arith.constant 805459861 : i32
    %217 = vector.broadcast %c805459861_i32_39 : i32 to vector<8x512xi32>
    %218 = arith.muli %216, %217 : vector<8x512xi32>
    %219 = arith.xori %213, %218 : vector<8x512xi32>
    %c16383_i32_40 = arith.constant 16383 : i32
    %220 = vector.broadcast %c16383_i32_40 : i32 to vector<8x512xi32>
    %221 = arith.andi %219, %220 : vector<8x512xi32>
    %c64 = arith.constant 64 : index
    %c0_41 = arith.constant 0 : index
    %222 = vector.load %arg4[%c64, %c0_41] : memref<128x512xi32, #tpu.memory_space<vmem>>, vector<8x512xi32>
    tpu.vector_store %arg4[%c64, %c0_41], %221 {strides = array<i32>} : memref<128x512xi32, #tpu.memory_space<vmem>>, vector<8x512xi32>,
    %223 = vector.extract_strided_slice %2 {offsets = [27, 0], sizes = [3, 1], strides = [1, 1]} : vector<48x1xf32> to vector<3x1xf32>
    %224 = vector.broadcast %223 : vector<3x1xf32> to vector<3x512xf32>
    %225 = arith.divf %4, %224 : vector<3x512xf32>
    %226 = math.floor %225 : vector<3x512xf32>
    %227 = arith.fptosi %226 : vector<3x512xf32> to vector<3x512xi32>
    %228 = vector.extract_strided_slice %227 {offsets = [0, 0], sizes = [1, 512], strides = [1, 1]} : vector<3x512xi32> to vector<1x512xi32>
    %229 = vector.broadcast %228 : vector<1x512xi32> to vector<8x512xi32>
    %230 = arith.addi %229, %9 : vector<8x512xi32>
    %231 = vector.extract_strided_slice %227 {offsets = [1, 0], sizes = [1, 512], strides = [1, 1]} : vector<3x512xi32> to vector<1x512xi32>
    %232 = vector.broadcast %231 : vector<1x512xi32> to vector<8x512xi32>
    %233 = arith.addi %232, %13 : vector<8x512xi32>
    %c-1640531535_i32_42 = arith.constant -1640531535 : i32
    %234 = vector.broadcast %c-1640531535_i32_42 : i32 to vector<8x512xi32>
    %235 = arith.muli %233, %234 : vector<8x512xi32>
    %236 = arith.xori %230, %235 : vector<8x512xi32>
    %237 = vector.extract_strided_slice %227 {offsets = [2, 0], sizes = [1, 512], strides = [1, 1]} : vector<3x512xi32> to vector<1x512xi32>
    %238 = vector.broadcast %237 : vector<1x512xi32> to vector<8x512xi32>
    %239 = arith.addi %238, %15 : vector<8x512xi32>
    %c805459861_i32_43 = arith.constant 805459861 : i32
    %240 = vector.broadcast %c805459861_i32_43 : i32 to vector<8x512xi32>
    %241 = arith.muli %239, %240 : vector<8x512xi32>
    %242 = arith.xori %236, %241 : vector<8x512xi32>
    %c16383_i32_44 = arith.constant 16383 : i32
    %243 = vector.broadcast %c16383_i32_44 : i32 to vector<8x512xi32>
    %244 = arith.andi %242, %243 : vector<8x512xi32>
    %c72 = arith.constant 72 : index
    %c0_45 = arith.constant 0 : index
    %245 = vector.load %arg4[%c72, %c0_45] : memref<128x512xi32, #tpu.memory_space<vmem>>, vector<8x512xi32>
    tpu.vector_store %arg4[%c72, %c0_45], %244 {strides = array<i32>} : memref<128x512xi32, #tpu.memory_space<vmem>>, vector<8x512xi32>,
    %246 = vector.extract_strided_slice %2 {offsets = [30, 0], sizes = [3, 1], strides = [1, 1]} : vector<48x1xf32> to vector<3x1xf32>
    %247 = vector.broadcast %246 : vector<3x1xf32> to vector<3x512xf32>
    %248 = arith.divf %4, %247 : vector<3x512xf32>
    %249 = math.floor %248 : vector<3x512xf32>
    %250 = arith.fptosi %249 : vector<3x512xf32> to vector<3x512xi32>
    %251 = vector.extract_strided_slice %250 {offsets = [0, 0], sizes = [1, 512], strides = [1, 1]} : vector<3x512xi32> to vector<1x512xi32>
    %252 = vector.broadcast %251 : vector<1x512xi32> to vector<8x512xi32>
    %253 = arith.addi %252, %9 : vector<8x512xi32>
    %254 = vector.extract_strided_slice %250 {offsets = [1, 0], sizes = [1, 512], strides = [1, 1]} : vector<3x512xi32> to vector<1x512xi32>
    %255 = vector.broadcast %254 : vector<1x512xi32> to vector<8x512xi32>
    %256 = arith.addi %255, %13 : vector<8x512xi32>
    %c-1640531535_i32_46 = arith.constant -1640531535 : i32
    %257 = vector.broadcast %c-1640531535_i32_46 : i32 to vector<8x512xi32>
    %258 = arith.muli %256, %257 : vector<8x512xi32>
    %259 = arith.xori %253, %258 : vector<8x512xi32>
    %260 = vector.extract_strided_slice %250 {offsets = [2, 0], sizes = [1, 512], strides = [1, 1]} : vector<3x512xi32> to vector<1x512xi32>
    %261 = vector.broadcast %260 : vector<1x512xi32> to vector<8x512xi32>
    %262 = arith.addi %261, %15 : vector<8x512xi32>
    %c805459861_i32_47 = arith.constant 805459861 : i32
    %263 = vector.broadcast %c805459861_i32_47 : i32 to vector<8x512xi32>
    %264 = arith.muli %262, %263 : vector<8x512xi32>
    %265 = arith.xori %259, %264 : vector<8x512xi32>
    %c16383_i32_48 = arith.constant 16383 : i32
    %266 = vector.broadcast %c16383_i32_48 : i32 to vector<8x512xi32>
    %267 = arith.andi %265, %266 : vector<8x512xi32>
    %c80 = arith.constant 80 : index
    %c0_49 = arith.constant 0 : index
    %268 = vector.load %arg4[%c80, %c0_49] : memref<128x512xi32, #tpu.memory_space<vmem>>, vector<8x512xi32>
    tpu.vector_store %arg4[%c80, %c0_49], %267 {strides = array<i32>} : memref<128x512xi32, #tpu.memory_space<vmem>>, vector<8x512xi32>,
    %269 = vector.extract_strided_slice %2 {offsets = [33, 0], sizes = [3, 1], strides = [1, 1]} : vector<48x1xf32> to vector<3x1xf32>
    %270 = vector.broadcast %269 : vector<3x1xf32> to vector<3x512xf32>
    %271 = arith.divf %4, %270 : vector<3x512xf32>
    %272 = math.floor %271 : vector<3x512xf32>
    %273 = arith.fptosi %272 : vector<3x512xf32> to vector<3x512xi32>
    %274 = vector.extract_strided_slice %273 {offsets = [0, 0], sizes = [1, 512], strides = [1, 1]} : vector<3x512xi32> to vector<1x512xi32>
    %275 = vector.broadcast %274 : vector<1x512xi32> to vector<8x512xi32>
    %276 = arith.addi %275, %9 : vector<8x512xi32>
    %277 = vector.extract_strided_slice %273 {offsets = [1, 0], sizes = [1, 512], strides = [1, 1]} : vector<3x512xi32> to vector<1x512xi32>
    %278 = vector.broadcast %277 : vector<1x512xi32> to vector<8x512xi32>
    %279 = arith.addi %278, %13 : vector<8x512xi32>
    %c-1640531535_i32_50 = arith.constant -1640531535 : i32
    %280 = vector.broadcast %c-1640531535_i32_50 : i32 to vector<8x512xi32>
    %281 = arith.muli %279, %280 : vector<8x512xi32>
    %282 = arith.xori %276, %281 : vector<8x512xi32>
    %283 = vector.extract_strided_slice %273 {offsets = [2, 0], sizes = [1, 512], strides = [1, 1]} : vector<3x512xi32> to vector<1x512xi32>
    %284 = vector.broadcast %283 : vector<1x512xi32> to vector<8x512xi32>
    %285 = arith.addi %284, %15 : vector<8x512xi32>
    %c805459861_i32_51 = arith.constant 805459861 : i32
    %286 = vector.broadcast %c805459861_i32_51 : i32 to vector<8x512xi32>
    %287 = arith.muli %285, %286 : vector<8x512xi32>
    %288 = arith.xori %282, %287 : vector<8x512xi32>
    %c16383_i32_52 = arith.constant 16383 : i32
    %289 = vector.broadcast %c16383_i32_52 : i32 to vector<8x512xi32>
    %290 = arith.andi %288, %289 : vector<8x512xi32>
    %c88 = arith.constant 88 : index
    %c0_53 = arith.constant 0 : index
    %291 = vector.load %arg4[%c88, %c0_53] : memref<128x512xi32, #tpu.memory_space<vmem>>, vector<8x512xi32>
    tpu.vector_store %arg4[%c88, %c0_53], %290 {strides = array<i32>} : memref<128x512xi32, #tpu.memory_space<vmem>>, vector<8x512xi32>,
    %292 = vector.extract_strided_slice %2 {offsets = [36, 0], sizes = [3, 1], strides = [1, 1]} : vector<48x1xf32> to vector<3x1xf32>
    %293 = vector.broadcast %292 : vector<3x1xf32> to vector<3x512xf32>
    %294 = arith.divf %4, %293 : vector<3x512xf32>
    %295 = math.floor %294 : vector<3x512xf32>
    %296 = arith.fptosi %295 : vector<3x512xf32> to vector<3x512xi32>
    %297 = vector.extract_strided_slice %296 {offsets = [0, 0], sizes = [1, 512], strides = [1, 1]} : vector<3x512xi32> to vector<1x512xi32>
    %298 = vector.broadcast %297 : vector<1x512xi32> to vector<8x512xi32>
    %299 = arith.addi %298, %9 : vector<8x512xi32>
    %300 = vector.extract_strided_slice %296 {offsets = [1, 0], sizes = [1, 512], strides = [1, 1]} : vector<3x512xi32> to vector<1x512xi32>
    %301 = vector.broadcast %300 : vector<1x512xi32> to vector<8x512xi32>
    %302 = arith.addi %301, %13 : vector<8x512xi32>
    %c-1640531535_i32_54 = arith.constant -1640531535 : i32
    %303 = vector.broadcast %c-1640531535_i32_54 : i32 to vector<8x512xi32>
    %304 = arith.muli %302, %303 : vector<8x512xi32>
    %305 = arith.xori %299, %304 : vector<8x512xi32>
    %306 = vector.extract_strided_slice %296 {offsets = [2, 0], sizes = [1, 512], strides = [1, 1]} : vector<3x512xi32> to vector<1x512xi32>
    %307 = vector.broadcast %306 : vector<1x512xi32> to vector<8x512xi32>
    %308 = arith.addi %307, %15 : vector<8x512xi32>
    %c805459861_i32_55 = arith.constant 805459861 : i32
    %309 = vector.broadcast %c805459861_i32_55 : i32 to vector<8x512xi32>
    %310 = arith.muli %308, %309 : vector<8x512xi32>
    %311 = arith.xori %305, %310 : vector<8x512xi32>
    %c16383_i32_56 = arith.constant 16383 : i32
    %312 = vector.broadcast %c16383_i32_56 : i32 to vector<8x512xi32>
    %313 = arith.andi %311, %312 : vector<8x512xi32>
    %c96 = arith.constant 96 : index
    %c0_57 = arith.constant 0 : index
    %314 = vector.load %arg4[%c96, %c0_57] : memref<128x512xi32, #tpu.memory_space<vmem>>, vector<8x512xi32>
    tpu.vector_store %arg4[%c96, %c0_57], %313 {strides = array<i32>} : memref<128x512xi32, #tpu.memory_space<vmem>>, vector<8x512xi32>,
    %315 = vector.extract_strided_slice %2 {offsets = [39, 0], sizes = [3, 1], strides = [1, 1]} : vector<48x1xf32> to vector<3x1xf32>
    %316 = vector.broadcast %315 : vector<3x1xf32> to vector<3x512xf32>
    %317 = arith.divf %4, %316 : vector<3x512xf32>
    %318 = math.floor %317 : vector<3x512xf32>
    %319 = arith.fptosi %318 : vector<3x512xf32> to vector<3x512xi32>
    %320 = vector.extract_strided_slice %319 {offsets = [0, 0], sizes = [1, 512], strides = [1, 1]} : vector<3x512xi32> to vector<1x512xi32>
    %321 = vector.broadcast %320 : vector<1x512xi32> to vector<8x512xi32>
    %322 = arith.addi %321, %9 : vector<8x512xi32>
    %323 = vector.extract_strided_slice %319 {offsets = [1, 0], sizes = [1, 512], strides = [1, 1]} : vector<3x512xi32> to vector<1x512xi32>
    %324 = vector.broadcast %323 : vector<1x512xi32> to vector<8x512xi32>
    %325 = arith.addi %324, %13 : vector<8x512xi32>
    %c-1640531535_i32_58 = arith.constant -1640531535 : i32
    %326 = vector.broadcast %c-1640531535_i32_58 : i32 to vector<8x512xi32>
    %327 = arith.muli %325, %326 : vector<8x512xi32>
    %328 = arith.xori %322, %327 : vector<8x512xi32>
    %329 = vector.extract_strided_slice %319 {offsets = [2, 0], sizes = [1, 512], strides = [1, 1]} : vector<3x512xi32> to vector<1x512xi32>
    %330 = vector.broadcast %329 : vector<1x512xi32> to vector<8x512xi32>
    %331 = arith.addi %330, %15 : vector<8x512xi32>
    %c805459861_i32_59 = arith.constant 805459861 : i32
    %332 = vector.broadcast %c805459861_i32_59 : i32 to vector<8x512xi32>
    %333 = arith.muli %331, %332 : vector<8x512xi32>
    %334 = arith.xori %328, %333 : vector<8x512xi32>
    %c16383_i32_60 = arith.constant 16383 : i32
    %335 = vector.broadcast %c16383_i32_60 : i32 to vector<8x512xi32>
    %336 = arith.andi %334, %335 : vector<8x512xi32>
    %c104 = arith.constant 104 : index
    %c0_61 = arith.constant 0 : index
    %337 = vector.load %arg4[%c104, %c0_61] : memref<128x512xi32, #tpu.memory_space<vmem>>, vector<8x512xi32>
    tpu.vector_store %arg4[%c104, %c0_61], %336 {strides = array<i32>} : memref<128x512xi32, #tpu.memory_space<vmem>>, vector<8x512xi32>,
    %338 = vector.extract_strided_slice %2 {offsets = [42, 0], sizes = [3, 1], strides = [1, 1]} : vector<48x1xf32> to vector<3x1xf32>
    %339 = vector.broadcast %338 : vector<3x1xf32> to vector<3x512xf32>
    %340 = arith.divf %4, %339 : vector<3x512xf32>
    %341 = math.floor %340 : vector<3x512xf32>
    %342 = arith.fptosi %341 : vector<3x512xf32> to vector<3x512xi32>
    %343 = vector.extract_strided_slice %342 {offsets = [0, 0], sizes = [1, 512], strides = [1, 1]} : vector<3x512xi32> to vector<1x512xi32>
    %344 = vector.broadcast %343 : vector<1x512xi32> to vector<8x512xi32>
    %345 = arith.addi %344, %9 : vector<8x512xi32>
    %346 = vector.extract_strided_slice %342 {offsets = [1, 0], sizes = [1, 512], strides = [1, 1]} : vector<3x512xi32> to vector<1x512xi32>
    %347 = vector.broadcast %346 : vector<1x512xi32> to vector<8x512xi32>
    %348 = arith.addi %347, %13 : vector<8x512xi32>
    %c-1640531535_i32_62 = arith.constant -1640531535 : i32
    %349 = vector.broadcast %c-1640531535_i32_62 : i32 to vector<8x512xi32>
    %350 = arith.muli %348, %349 : vector<8x512xi32>
    %351 = arith.xori %345, %350 : vector<8x512xi32>
    %352 = vector.extract_strided_slice %342 {offsets = [2, 0], sizes = [1, 512], strides = [1, 1]} : vector<3x512xi32> to vector<1x512xi32>
    %353 = vector.broadcast %352 : vector<1x512xi32> to vector<8x512xi32>
    %354 = arith.addi %353, %15 : vector<8x512xi32>
    %c805459861_i32_63 = arith.constant 805459861 : i32
    %355 = vector.broadcast %c805459861_i32_63 : i32 to vector<8x512xi32>
    %356 = arith.muli %354, %355 : vector<8x512xi32>
    %357 = arith.xori %351, %356 : vector<8x512xi32>
    %c16383_i32_64 = arith.constant 16383 : i32
    %358 = vector.broadcast %c16383_i32_64 : i32 to vector<8x512xi32>
    %359 = arith.andi %357, %358 : vector<8x512xi32>
    %c112 = arith.constant 112 : index
    %c0_65 = arith.constant 0 : index
    %360 = vector.load %arg4[%c112, %c0_65] : memref<128x512xi32, #tpu.memory_space<vmem>>, vector<8x512xi32>
    tpu.vector_store %arg4[%c112, %c0_65], %359 {strides = array<i32>} : memref<128x512xi32, #tpu.memory_space<vmem>>, vector<8x512xi32>,
    %361 = vector.extract_strided_slice %2 {offsets = [45, 0], sizes = [3, 1], strides = [1, 1]} : vector<48x1xf32> to vector<3x1xf32>
    %362 = vector.broadcast %361 : vector<3x1xf32> to vector<3x512xf32>
    %363 = arith.divf %4, %362 : vector<3x512xf32>
    %364 = math.floor %363 : vector<3x512xf32>
    %365 = arith.fptosi %364 : vector<3x512xf32> to vector<3x512xi32>
    %366 = vector.extract_strided_slice %365 {offsets = [0, 0], sizes = [1, 512], strides = [1, 1]} : vector<3x512xi32> to vector<1x512xi32>
    %367 = vector.broadcast %366 : vector<1x512xi32> to vector<8x512xi32>
    %368 = arith.addi %367, %9 : vector<8x512xi32>
    %369 = vector.extract_strided_slice %365 {offsets = [1, 0], sizes = [1, 512], strides = [1, 1]} : vector<3x512xi32> to vector<1x512xi32>
    %370 = vector.broadcast %369 : vector<1x512xi32> to vector<8x512xi32>
    %371 = arith.addi %370, %13 : vector<8x512xi32>
    %c-1640531535_i32_66 = arith.constant -1640531535 : i32
    %372 = vector.broadcast %c-1640531535_i32_66 : i32 to vector<8x512xi32>
    %373 = arith.muli %371, %372 : vector<8x512xi32>
    %374 = arith.xori %368, %373 : vector<8x512xi32>
    %375 = vector.extract_strided_slice %365 {offsets = [2, 0], sizes = [1, 512], strides = [1, 1]} : vector<3x512xi32> to vector<1x512xi32>
    %376 = vector.broadcast %375 : vector<1x512xi32> to vector<8x512xi32>
    %377 = arith.addi %376, %15 : vector<8x512xi32>
    %c805459861_i32_67 = arith.constant 805459861 : i32
    %378 = vector.broadcast %c805459861_i32_67 : i32 to vector<8x512xi32>
    %379 = arith.muli %377, %378 : vector<8x512xi32>
    %380 = arith.xori %374, %379 : vector<8x512xi32>
    %c16383_i32_68 = arith.constant 16383 : i32
    %381 = vector.broadcast %c16383_i32_68 : i32 to vector<8x512xi32>
    %382 = arith.andi %380, %381 : vector<8x512xi32>
    %c120 = arith.constant 120 : index
    %c0_69 = arith.constant 0 : index
    %383 = vector.load %arg4[%c120, %c0_69] : memref<128x512xi32, #tpu.memory_space<vmem>>, vector<8x512xi32>
    tpu.vector_store %arg4[%c120, %c0_69], %382 {strides = array<i32>} : memref<128x512xi32, #tpu.memory_space<vmem>>, vector<8x512xi32>,
    return
  }
  func.func @transform_0(%arg0: i32) -> (i32, i32) {
    %c0_i32 = arith.constant 0 : i32
    %c0_i32_0 = arith.constant 0 : i32
    return %c0_i32, %arg0 : i32, i32
  }
  func.func @transform_1(%arg0: i32) -> (i32, i32) {
    %c0_i32 = arith.constant 0 : i32
    %c0_i32_0 = arith.constant 0 : i32
    %c0_i32_1 = arith.constant 0 : i32
    return %c0_i32, %c0_i32_0 : i32, i32
  }
  func.func @transform_2(%arg0: i32) -> (i32, i32) {
    %c0_i32 = arith.constant 0 : i32
    %c0_i32_0 = arith.constant 0 : i32
    %c0_i32_1 = arith.constant 0 : i32
    return %c0_i32, %c0_i32_0 : i32, i32
  }
  func.func @transform_3(%arg0: i32) -> (i32, i32) {
    %c0_i32 = arith.constant 0 : i32
    %c0_i32_0 = arith.constant 0 : i32
    return %c0_i32, %arg0 : i32, i32
  }
}

</mosaic_0001>

<llo_original>
// kernel: tpu_custom_call.1
$region0: #{tpu_custom_call.1}
  #allocation0 [shape = 'u32[]', space=smem, size = 0x4, offset = 0x4, fixed_abs, tag = 'smem constant byte address 0x4 - core index']
  #allocation1 [shape = 'u32[72,128]{1,0:T(1,128)}', space=vmem, size = 0x9000, scoped, tag = 'internal scratch']
  %s0 = inlined_call_operand.hbm [shape: f32[3,2048], index: 0, kind: input, shape index: {}]
  %s1 = inlined_call_operand.vmem [shape: f32[3,1], index: 1, kind: input, shape index: {}]
  %s2 = inlined_call_operand.vmem [shape: f32[48,1], index: 2, kind: input, shape index: {}]
  %s3 = inlined_call_operand.hbm [shape: s32[128,2048], index: 3, kind: output, shape index: {}]
  %s4 = sld [smem:[#allocation0]]
  $region49: #{tpu_custom_call.1} parent=0
    _
  %s6 = ssub.s32 1, %s4
  %s7 = scalar_select 0, %s6, %s4
  $region1: #{tpu_custom_call.1} parent=0
    #allocation2 [shape = 'u8[16384]{0}', space=vmem, size = 0x4000, scoped, tag = 'input window, operand 0']
    #allocation3 [shape = 's32[2]{0}', space=sflag, size = 0x8, scoped, tag = 'scoped memory for tpu_custom_call.1']
    #allocation4 [shape = 's32[2]{0}', space=sflag, size = 0x8, scoped, tag = 'scoped memory for tpu_custom_call.1']
    #allocation5 [shape = 'u8[524288]{0}', space=vmem, size = 0x80000, scoped, tag = 'output window, operand 0']
    %8 = vsyncpa [#allocation3], 0
    %s9 = scalar_lea.sflag [#allocation3], 1
    %10 = vsyncpa %s9, 0
    %11 = vsyncpa [#allocation4], 0
    %s12 = scalar_lea.sflag [#allocation4], 1
    %13 = vsyncpa %s12, 0
    loop: start=0, step=1, limit=6
    $region2: #{tpu_custom_call.1} parent=1 // loop_pre_header
      _
    $region3: #{tpu_custom_call.1} parent=1 // loop_header
      %s15 = sphi 0, %s19
      %p16 = scmp.ge.s32.totalorder %s15, 6
      %s25 = sphi 0, %s27
      %s28 = sphi 0, %s25
      %s29 = sphi 0, %s28
      %s45 = sphi 0, %s29
      %s49 = sphi 0, %s49
      %s51 = sphi 0, %s49
      %s52 = sphi 0, %s51
      %s66 = sphi 0, %s52
      %s70 = sphi 0, %s70
      %s72 = sphi 0, %s70
      %s73 = sphi 0, %s72
      %s87 = sphi 0, %s73
      %s93 = sphi 0, %s95
      %s96 = sphi 0, %s93
      %s97 = sphi 0, %s96
      %s113 = sphi 0, %s97
    $region4: #{tpu_custom_call.1} parent=1 // loop_header_branch
      %18 = sbr.rel (%p16) target = $region8
    $region5: #{tpu_custom_call.1} parent=1 // loop_body
      %s20 = ssub.s32 %s15, 1
      %s21 = ssub.s32 %s15, 2
      %s22 = sadd.s32 %s15, 1
      %s23 = ssub.s32 %s15, %s22
      %p24 = scmp.eq.s32.totalorder %s23, 0
      %s26 = sadd.s32 %s25, 1
      %s27 = scalar_select %p24, %s25, %s26
      %p30 = pneg %p24
      %p31 = scmp.eq.s32.totalorder %s15, 3
      %p32 = por %p30, %p31
      %p33 = scmp.ne.s32.totalorder %s25, %s28
      %p34 = scmp.eq.s32.totalorder %s15, 0
      %p35 = por %p33, %p34
      %p36 = scmp.ne.s32.totalorder %s25, %s28
      %p37 = scmp.eq.s32.totalorder %s20, 3
      %p38 = por %p36, %p37
      %p39 = scmp.ne.s32.totalorder %s28, %s29
      %p40 = scmp.eq.s32.totalorder %s20, 0
      %p41 = por %p39, %p40
      %p42 = scmp.ne.s32.totalorder %s28, %s29
      %p43 = scmp.eq.s32.totalorder %s21, 3
      %p44 = por %p42, %p43
      %p46 = scmp.ne.s32.totalorder %s29, %s45
      %p47 = scmp.eq.s32.totalorder %s21, 0
      %p48 = por %p46, %p47
      %s50 = sadd.s32 %s49, 1
      %p53 = scmp.eq.s32.totalorder %s15, 3
      %p54 = scmp.ne.s32.totalorder %s49, %s51
      %p55 = scmp.eq.s32.totalorder %s15, 0
      %p56 = por %p54, %p55
      %p57 = scmp.ne.s32.totalorder %s49, %s51
      %p58 = scmp.eq.s32.totalorder %s20, 3
      %p59 = por %p57, %p58
      %p60 = scmp.ne.s32.totalorder %s51, %s52
      %p61 = scmp.eq.s32.totalorder %s20, 0
      %p62 = por %p60, %p61
      %p63 = scmp.ne.s32.totalorder %s51, %s52
      %p64 = scmp.eq.s32.totalorder %s21, 3
      %p65 = por %p63, %p64
      %p67 = scmp.ne.s32.totalorder %s52, %s66
      %p68 = scmp.eq.s32.totalorder %s21, 0
      %p69 = por %p67, %p68
      %s71 = sadd.s32 %s70, 1
      %p74 = scmp.eq.s32.totalorder %s15, 3
      %p75 = scmp.ne.s32.totalorder %s70, %s72
      %p76 = scmp.eq.s32.totalorder %s15, 0
      %p77 = por %p75, %p76
      %p78 = scmp.ne.s32.totalorder %s70, %s72
      %p79 = scmp.eq.s32.totalorder %s20, 3
      %p80 = por %p78, %p79
      %p81 = scmp.ne.s32.totalorder %s72, %s73
      %p82 = scmp.eq.s32.totalorder %s20, 0
      %p83 = por %p81, %p82
      %p84 = scmp.ne.s32.totalorder %s72, %s73
      %p85 = scmp.eq.s32.totalorder %s21, 3
      %p86 = por %p84, %p85
      %p88 = scmp.ne.s32.totalorder %s73, %s87
      %p89 = scmp.eq.s32.totalorder %s21, 0
      %p90 = por %p88, %p89
      %s91 = ssub.s32 %s15, %s22
      %p92 = scmp.eq.s32.totalorder %s91, 0
      %s94 = sadd.s32 %s93, 1
      %s95 = scalar_select %p92, %s93, %s94
      %p98 = pneg %p92
      %p99 = scmp.eq.s32.totalorder %s15, 3
      %p100 = por %p98, %p99
      %p101 = scmp.ne.s32.totalorder %s93, %s96
      %p102 = scmp.eq.s32.totalorder %s15, 0
      %p103 = por %p101, %p102
      %p104 = scmp.ne.s32.totalorder %s93, %s96
      %p105 = scmp.eq.s32.totalorder %s20, 3
      %p106 = por %p104, %p105
      %p107 = scmp.ne.s32.totalorder %s96, %s97
      %p108 = scmp.eq.s32.totalorder %s20, 0
      %p109 = por %p107, %p108
      %p110 = scmp.ne.s32.totalorder %s96, %s97
      %p111 = scmp.eq.s32.totalorder %s21, 3
      %p112 = por %p110, %p111
      %p114 = scmp.ne.s32.totalorder %s97, %s113
      %p115 = scmp.eq.s32.totalorder %s21, 0
      %p116 = por %p114, %p115
      %p117 = scmp.le.s32.totalorder 1, %s15
      %p118 = scmp.lt.s32.totalorder %s15, 5
      %p119 = pnand %p117, %p118
      %p120 = pneg %p119
      // Predicated region
      $region9: #{tpu_custom_call.1} parent=5 // pred_check
        _
      $region10: #{tpu_custom_call.1} parent=5 // pred_check_branch
        %122 = sbr.rel (%p119) target = $region12
      $region11: #{tpu_custom_call.1} parent=5 // pred_region
        %s123 = ssub.s32 %s15, 1
        // Predicated region
        $region13: #{tpu_custom_call.1} parent=11 // pred_check
          %p124 = pneg %p62
        $region14: #{tpu_custom_call.1} parent=11 // pred_check_branch
          %126 = sbr.rel (%p124) target = $region16
        $region15: #{tpu_custom_call.1} parent=11 // pred_region
          _
        $region16: #{tpu_custom_call.1} parent=11 // pred_fallthru
          _
        // Predicated region
        $region17: #{tpu_custom_call.1} parent=11 // pred_check
          %p127 = pneg %p83
        $region18: #{tpu_custom_call.1} parent=11 // pred_check_branch
          %129 = sbr.rel (%p127) target = $region20
        $region19: #{tpu_custom_call.1} parent=11 // pred_region
          _
        $region20: #{tpu_custom_call.1} parent=11 // pred_fallthru
          _
      $region12: #{tpu_custom_call.1} parent=5 // pred_fallthru
        _
      %p130 = scmp.lt.s32.totalorder %s15, 4
      // Predicated region
      $region21: #{tpu_custom_call.1} parent=5 // pred_check
        %p131 = pneg %p130
      $region22: #{tpu_custom_call.1} parent=5 // pred_check_branch
        %133 = sbr.rel (%p131) target = $region24
      $region23: #{tpu_custom_call.1} parent=5 // pred_region
        // Predicated region
        $region25: #{tpu_custom_call.1} parent=23 // pred_check
          %p134 = pneg %p35
        $region26: #{tpu_custom_call.1} parent=23 // pred_check_branch
          %136 = sbr.rel (%p134) target = $region28
        $region27: #{tpu_custom_call.1} parent=23 // pred_region
          %s137 = sand.u32 %s25, 1
          %s138 = scalar_lea.sflag [#allocation3], %s137
          %s139 = sand.u32 %s25, 1
          %s140 = smul.addr %s139, 16
          %s141 = scalar_lea.vmem [#allocation2], %s140
          %s142 = smul.u32 4, %s15
          %144 = vsyncadd %s138, 0
          %s145 = smul.addr %s142, 4
          %s146 = scalar_lea.hbm %s0, %s145
          %s148 = sshll.u32 %s146, 4
          %s149 = int_to_ptr.hbm [resolvable:$true] %s148
          %s150 = sshll.u32 %s141, 4
          %s151 = int_to_ptr.vmem [resolvable:$true] %s150
          %153 = dma.hbm_to_vmem [thread:$0]  %s149, 256, %s151, %s138
        $region28: #{tpu_custom_call.1} parent=23 // pred_fallthru
          _
      $region24: #{tpu_custom_call.1} parent=5 // pred_fallthru
        _
      %p154 = scmp.le.s32.totalorder 1, %s15
      %p155 = scmp.lt.s32.totalorder %s15, 5
      %p156 = pnand %p154, %p155
      %p157 = pneg %p156
      // Predicated region
      $region29: #{tpu_custom_call.1} parent=5 // pred_check
        _
      $region30: #{tpu_custom_call.1} parent=5 // pred_check_branch
        %159 = sbr.rel (%p156) target = $region32
      $region31: #{tpu_custom_call.1} parent=5 // pred_region
        %s160 = ssub.s32 %s15, 1
        %s161 = sand.u32 %s28, 1
        %s162 = scalar_lea.sflag [#allocation3], %s161
        %s163 = sand.u32 %s28, 1
        %s164 = smul.addr %s163, 16
        %s165 = scalar_lea.vmem [#allocation2], %s164
        // Predicated region
        $region33: #{tpu_custom_call.1} parent=31 // pred_check
          %p166 = pneg %p41
        $region34: #{tpu_custom_call.1} parent=31 // pred_check_branch
          %168 = sbr.rel (%p166) target = $region36
        $region35: #{tpu_custom_call.1} parent=31 // pred_region
          %170 = dma.done %s162, 256
        $region36: #{tpu_custom_call.1} parent=31 // pred_fallthru
          _
        %s171 = sand.u32 %s28, 1
        %s172 = scalar_lea.sflag [#allocation3], %s171
        %s173 = sand.u32 %s28, 1
        %s174 = smul.addr %s173, 16
        %s175 = scalar_lea.vmem [#allocation2], %s174
        %p176 = pneg %p41
        %p177 = pneg %p38
        %p178 = pneg %p62
        %p179 = pneg %p59
        %p180 = pneg %p83
        %p181 = pneg %p80
        %p182 = pneg %p109
        %p183 = pneg %p106
        %s184 = sand.u32 %s96, 1
        %s185 = scalar_lea.sflag [#allocation4], %s184
        %s186 = sand.u32 %s96, 1
        %s187 = smul.addr %s186, 512
        %s188 = scalar_lea.vmem [#allocation5], %s187
        %s189 = smul.u32 4, %s20
        %s190 = smul.u32 4, %s20
        %v191 = vld [vmem:[%s165] sm:$0x77]
        %v192 = vld [vmem:[%s165 + $0x8] sm:$0x77]
        %v193 = vld [vmem:[%s1] sm:$0x7]
        %v194 = vld [vmem:[%s2] sm:$0xff]
        %v195 = vld [vmem:[%s2 + $0x8] sm:$0xff]
        %v196 = vld [vmem:[%s2 + $0x10] sm:$0xff]
        %v197 = vld [vmem:[%s2 + $0x18] sm:$0xff]
        %v198 = vld [vmem:[%s2 + $0x20] sm:$0xff]
        %v199 = vld [vmem:[%s2 + $0x28] sm:$0xff]
        %201 = vset.pattern.permute.xlu0 0
        %202 = vperm.xlu0 %201, %v193
        %v203 = vpop.permute.xlu0 %202
        %v205 = vunpack.c.l.s4 839922192
        %v206 = vunpack.c.0.s8 %v205
        %v207 = vperm.slane %v203, %v206
        %v209 = vsub.f32 %v191, %v207
        %v210 = vsub.f32 %v192, %v207
        %v211 = vlaneseq
        %v212 = vshrl.u32 %v211, 7
        %v213 = vshra.s32 %v212, 2
        %v214 = vand.u32 %v213, 1
        %v215 = vshra.s32 %v212, 1
        %v216 = vand.u32 %v215, 1
        %v217 = vand.u32 %v212, 1
        %219 = vset.pattern.permute.xlu0 0
        %220 = vperm.xlu0 %219, %v194
        %v221 = vpop.permute.xlu0 %220
        %v223 = vunpack.c.l.s4 839922192
        %v224 = vunpack.c.0.s8 %v223
        %v225 = vperm.slane %v221, %v224
        %v227 = vrcp.pop %v225
        %v228 = vmul.f32 %v225, %v227
        %v229 = vsub.f32 1.0, %v228
        %v230 = vmul.f32 %v227, %v229
        %v231 = vadd.f32 %v227, %v230
        %vm232 = vweird.f32 %v225
        %vm233 = vweird.f32 %v227
        %vm234 = vmor %vm232, %vm233
        %v235 = vsel %vm234, %v227, %v231
        %v236 = vand.u32 2147483647, %v225
        %vm237 = vcmp.eq.f32.partialorder %v236, 8.507059e+37
        %v238 = vand.u32 %v225, 2147483648
        %v239 = vor.u32 1.1754944e-38, %v238
        %v240 = vsel %vm237, %v239, %v235
        %v241 = vmul.f32 %v209, %v240
        %v242 = vmul.f32 %v210, %v240
        %v243 = vfloor.f32 %v241
        %v244 = vfloor.f32 %v242
        %v245 = vcvt.f32.s32.to.zero.pseudo %v243
        %v246 = vcvt.f32.s32.to.zero.pseudo %v244
        %v247 = vperm.slane %v245, 0
        %v248 = vperm.slane %v245, 4
        %v249 = vperm.slane %v246, 0
        %v250 = vperm.slane %v246, 4
        %v251 = vperm.slane %v247, 0
        %v252 = vperm.slane %v248, 0
        %v253 = vperm.slane %v249, 0
        %v254 = vperm.slane %v250, 0
        %v255 = vadd.s32 %v251, %v214
        %v256 = vadd.s32 %v252, %v214
        %v257 = vadd.s32 %v253, %v214
        %v258 = vadd.s32 %v254, %v214
        %v259 = vperm.slane %v245, 1
        %v260 = vperm.slane %v245, 5
        %v261 = vperm.slane %v246, 1
        %v262 = vperm.slane %v246, 5
        %v263 = vperm.slane %v259, 1
        %v264 = vperm.slane %v260, 1
        %v265 = vperm.slane %v261, 1
        %v266 = vperm.slane %v262, 1
        %v267 = vadd.s32 %v263, %v216
        %v268 = vadd.s32 %v264, %v216
        %v269 = vadd.s32 %v265, %v216
        %v270 = vadd.s32 %v266, %v216
        %v271 = vmul.u32 %v267, 2654435761
        %v272 = vmul.u32 %v268, 2654435761
        %v273 = vmul.u32 %v269, 2654435761
        %v274 = vmul.u32 %v270, 2654435761
        %v275 = vxor.u32 %v255, %v271
        %v276 = vxor.u32 %v256, %v272
        %v277 = vxor.u32 %v257, %v273
        %v278 = vxor.u32 %v258, %v274
        %v279 = vperm.slane %v245, 2
        %v280 = vperm.slane %v245, 6
        %v281 = vperm.slane %v246, 2
        %v282 = vperm.slane %v246, 6
        %v283 = vperm.slane %v279, 2
        %v284 = vperm.slane %v280, 2
        %v285 = vperm.slane %v281, 2
        %v286 = vperm.slane %v282, 2
        %v287 = vadd.s32 %v283, %v217
        %v288 = vadd.s32 %v284, %v217
        %v289 = vadd.s32 %v285, %v217
        %v290 = vadd.s32 %v286, %v217
        %v291 = vmul.u32 %v287, 805459861
        %v292 = vmul.u32 %v288, 805459861
        %v293 = vmul.u32 %v289, 805459861
        %v294 = vmul.u32 %v290, 805459861
        %v295 = vxor.u32 %v275, %v291
        %v296 = vxor.u32 %v276, %v292
        %v297 = vxor.u32 %v277, %v293
        %v298 = vxor.u32 %v278, %v294
        %v299 = vand.u32 %v295, 16383
        %v300 = vand.u32 %v296, 16383
        %v301 = vand.u32 %v297, 16383
        %v302 = vand.u32 %v298, 16383
        %303 = vst [vmem:[%s188] sm:$0xff] %v299
        %304 = vst [vmem:[%s188 + $0x8] sm:$0xff] %v300
        %305 = vst [vmem:[%s188 + $0x10] sm:$0xff] %v301
        %306 = vst [vmem:[%s188 + $0x18] sm:$0xff] %v302
        %v308 = vunpack.c.l.s4 1985246804
        %v309 = vunpack.c.0.s8 %v308
        %v310 = vperm.slane %v221, %v309
        %vm311 = vcmask 1040384
        %vm312 = vcmask 1044484
        %vm313 = vmor %vm311, %vm312
        %v314 = vrot.slane %v225, 7
        %v315 = vrot.slane %v314, 4
        %v316 = vrot.slane %v310, 7
        %v317 = vsel %vm313, %v315, %v316
        %v319 = vrcp.pop %v317
        %v320 = vmul.f32 %v317, %v319
        %v321 = vsub.f32 1.0, %v320
        %v322 = vmul.f32 %v319, %v321
        %v323 = vadd.f32 %v319, %v322
        %vm324 = vweird.f32 %v317
        %vm325 = vweird.f32 %v319
        %vm326 = vmor %vm324, %vm325
        %v327 = vsel %vm326, %v319, %v323
        %v328 = vand.u32 2147483647, %v317
        %vm329 = vcmp.eq.f32.partialorder %v328, 8.507059e+37
        %v330 = vand.u32 %v317, 2147483648
        %v331 = vor.u32 1.1754944e-38, %v330
        %v332 = vsel %vm329, %v331, %v327
        %v333 = vmul.f32 %v209, %v332
        %v334 = vmul.f32 %v210, %v332
        %v335 = vfloor.f32 %v333
        %v336 = vfloor.f32 %v334
        %v337 = vcvt.f32.s32.to.zero.pseudo %v335
        %v338 = vcvt.f32.s32.to.zero.pseudo %v336
        %v339 = vperm.slane %v337, 0
        %v340 = vperm.slane %v337, 4
        %v341 = vperm.slane %v338, 0
        %v342 = vperm.slane %v338, 4
        %v343 = vperm.slane %v339, 0
        %v344 = vperm.slane %v340, 0
        %v345 = vperm.slane %v341, 0
        %v346 = vperm.slane %v342, 0
        %v347 = vadd.s32 %v343, %v214
        %v348 = vadd.s32 %v344, %v214
        %v349 = vadd.s32 %v345, %v214
        %v350 = vadd.s32 %v346, %v214
        %v351 = vperm.slane %v337, 1
        %v352 = vperm.slane %v337, 5
        %v353 = vperm.slane %v338, 1
        %v354 = vperm.slane %v338, 5
        %v355 = vperm.slane %v351, 1
        %v356 = vperm.slane %v352, 1
        %v357 = vperm.slane %v353, 1
        %v358 = vperm.slane %v354, 1
        %v359 = vadd.s32 %v355, %v216
        %v360 = vadd.s32 %v356, %v216
        %v361 = vadd.s32 %v357, %v216
        %v362 = vadd.s32 %v358, %v216
        %v363 = vmul.u32 %v359, 2654435761
        %v364 = vmul.u32 %v360, 2654435761
        %v365 = vmul.u32 %v361, 2654435761
        %v366 = vmul.u32 %v362, 2654435761
        %v367 = vxor.u32 %v347, %v363
        %v368 = vxor.u32 %v348, %v364
        %v369 = vxor.u32 %v349, %v365
        %v370 = vxor.u32 %v350, %v366
        %v371 = vperm.slane %v337, 2
        %v372 = vperm.slane %v337, 6
        %v373 = vperm.slane %v338, 2
        %v374 = vperm.slane %v338, 6
        %v375 = vperm.slane %v371, 2
        %v376 = vperm.slane %v372, 2
        %v377 = vperm.slane %v373, 2
        %v378 = vperm.slane %v374, 2
        %v379 = vadd.s32 %v375, %v217
        %v380 = vadd.s32 %v376, %v217
        %v381 = vadd.s32 %v377, %v217
        %v382 = vadd.s32 %v378, %v217
        %v383 = vmul.u32 %v379, 805459861
        %v384 = vmul.u32 %v380, 805459861
        %v385 = vmul.u32 %v381, 805459861
        %v386 = vmul.u32 %v382, 805459861
        %v387 = vxor.u32 %v367, %v383
        %v388 = vxor.u32 %v368, %v384
        %v389 = vxor.u32 %v369, %v385
        %v390 = vxor.u32 %v370, %v386
        %v391 = vand.u32 %v387, 16383
        %v392 = vand.u32 %v388, 16383
        %v393 = vand.u32 %v389, 16383
        %v394 = vand.u32 %v390, 16383
        %395 = vst [vmem:[%s188 + $0x20] sm:$0xff] %v391
        %396 = vst [vmem:[%s188 + $0x28] sm:$0xff] %v392
        %397 = vst [vmem:[%s188 + $0x30] sm:$0xff] %v393
        %398 = vst [vmem:[%s188 + $0x38] sm:$0xff] %v394
        %400 = vset.pattern.permute.xlu0 0
        %401 = vperm.xlu0 %400, %v195
        %v402 = vpop.permute.xlu0 %401
        %v404 = vunpack.c.l.s4 839922192
        %v405 = vunpack.c.0.s8 %v404
        %v406 = vperm.slane %v402, %v405
        %vm407 = vcmask 1041408
        %vm408 = vcmask 1045508
        %vm409 = vmor %vm407, %vm408
        %v410 = vrot.slane %v310, 6
        %v411 = vrot.slane %v410, 4
        %v412 = vrot.slane %v406, 6
        %v413 = vsel %vm409, %v411, %v412
        %v415 = vrcp.pop %v413
        %v416 = vmul.f32 %v413, %v415
        %v417 = vsub.f32 1.0, %v416
        %v418 = vmul.f32 %v415, %v417
        %v419 = vadd.f32 %v415, %v418
        %vm420 = vweird.f32 %v413
        %vm421 = vweird.f32 %v415
        %vm422 = vmor %vm420, %vm421
        %v423 = vsel %vm422, %v415, %v419
        %v424 = vand.u32 2147483647, %v413
        %vm425 = vcmp.eq.f32.partialorder %v424, 8.507059e+37
        %v426 = vand.u32 %v413, 2147483648
        %v427 = vor.u32 1.1754944e-38, %v426
        %v428 = vsel %vm425, %v427, %v423
        %v429 = vmul.f32 %v209, %v428
        %v430 = vmul.f32 %v210, %v428
        %v431 = vfloor.f32 %v429
        %v432 = vfloor.f32 %v430
        %v433 = vcvt.f32.s32.to.zero.pseudo %v431
        %v434 = vcvt.f32.s32.to.zero.pseudo %v432
        %v435 = vperm.slane %v433, 0
        %v436 = vperm.slane %v433, 4
        %v437 = vperm.slane %v434, 0
        %v438 = vperm.slane %v434, 4
        %v439 = vperm.slane %v435, 0
        %v440 = vperm.slane %v436, 0
        %v441 = vperm.slane %v437, 0
        %v442 = vperm.slane %v438, 0
        %v443 = vadd.s32 %v439, %v214
        %v444 = vadd.s32 %v440, %v214
        %v445 = vadd.s32 %v441, %v214
        %v446 = vadd.s32 %v442, %v214
        %v447 = vperm.slane %v433, 1
        %v448 = vperm.slane %v433, 5
        %v449 = vperm.slane %v434, 1
        %v450 = vperm.slane %v434, 5
        %v451 = vperm.slane %v447, 1
        %v452 = vperm.slane %v448, 1
        %v453 = vperm.slane %v449, 1
        %v454 = vperm.slane %v450, 1
        %v455 = vadd.s32 %v451, %v216
        %v456 = vadd.s32 %v452, %v216
        %v457 = vadd.s32 %v453, %v216
        %v458 = vadd.s32 %v454, %v216
        %v459 = vmul.u32 %v455, 2654435761
        %v460 = vmul.u32 %v456, 2654435761
        %v461 = vmul.u32 %v457, 2654435761
        %v462 = vmul.u32 %v458, 2654435761
        %v463 = vxor.u32 %v443, %v459
        %v464 = vxor.u32 %v444, %v460
        %v465 = vxor.u32 %v445, %v461
        %v466 = vxor.u32 %v446, %v462
        %v467 = vperm.slane %v433, 2
        %v468 = vperm.slane %v433, 6
        %v469 = vperm.slane %v434, 2
        %v470 = vperm.slane %v434, 6
        %v471 = vperm.slane %v467, 2
        %v472 = vperm.slane %v468, 2
        %v473 = vperm.slane %v469, 2
        %v474 = vperm.slane %v470, 2
        %v475 = vadd.s32 %v471, %v217
        %v476 = vadd.s32 %v472, %v217
        %v477 = vadd.s32 %v473, %v217
        %v478 = vadd.s32 %v474, %v217
        %v479 = vmul.u32 %v475, 805459861
        %v480 = vmul.u32 %v476, 805459861
        %v481 = vmul.u32 %v477, 805459861
        %v482 = vmul.u32 %v478, 805459861
        %v483 = vxor.u32 %v463, %v479
        %v484 = vxor.u32 %v464, %v480
        %v485 = vxor.u32 %v465, %v481
        %v486 = vxor.u32 %v466, %v482
        %v487 = vand.u32 %v483, 16383
        %v488 = vand.u32 %v484, 16383
        %v489 = vand.u32 %v485, 16383
        %v490 = vand.u32 %v486, 16383
        %491 = vst [vmem:[%s188 + $0x40] sm:$0xff] %v487
        %492 = vst [vmem:[%s188 + $0x48] sm:$0xff] %v488
        %493 = vst [vmem:[%s188 + $0x50] sm:$0xff] %v489
        %494 = vst [vmem:[%s188 + $0x58] sm:$0xff] %v490
        %v495 = vrot.slane %v406, 5
        %v496 = vrot.slane %v495, 4
        %v498 = vrcp.pop %v496
        %v499 = vmul.f32 %v496, %v498
        %v500 = vsub.f32 1.0, %v499
        %v501 = vmul.f32 %v498, %v500
        %v502 = vadd.f32 %v498, %v501
        %vm503 = vweird.f32 %v496
        %vm504 = vweird.f32 %v498
        %vm505 = vmor %vm503, %vm504
        %v506 = vsel %vm505, %v498, %v502
        %v507 = vand.u32 2147483647, %v496
        %vm508 = vcmp.eq.f32.partialorder %v507, 8.507059e+37
        %v509 = vand.u32 %v496, 2147483648
        %v510 = vor.u32 1.1754944e-38, %v509
        %v511 = vsel %vm508, %v510, %v506
        %v512 = vmul.f32 %v209, %v511
        %v513 = vmul.f32 %v210, %v511
        %v514 = vfloor.f32 %v512
        %v515 = vfloor.f32 %v513
        %v516 = vcvt.f32.s32.to.zero.pseudo %v514
        %v517 = vcvt.f32.s32.to.zero.pseudo %v515
        %v518 = vperm.slane %v516, 0
        %v519 = vperm.slane %v516, 4
        %v520 = vperm.slane %v517, 0
        %v521 = vperm.slane %v517, 4
        %v522 = vperm.slane %v518, 0
        %v523 = vperm.slane %v519, 0
        %v524 = vperm.slane %v520, 0
        %v525 = vperm.slane %v521, 0
        %v526 = vadd.s32 %v522, %v214
        %v527 = vadd.s32 %v523, %v214
        %v528 = vadd.s32 %v524, %v214
        %v529 = vadd.s32 %v525, %v214
        %v530 = vperm.slane %v516, 1
        %v531 = vperm.slane %v516, 5
        %v532 = vperm.slane %v517, 1
        %v533 = vperm.slane %v517, 5
        %v534 = vperm.slane %v530, 1
        %v535 = vperm.slane %v531, 1
        %v536 = vperm.slane %v532, 1
        %v537 = vperm.slane %v533, 1
        %v538 = vadd.s32 %v534, %v216
        %v539 = vadd.s32 %v535, %v216
        %v540 = vadd.s32 %v536, %v216
        %v541 = vadd.s32 %v537, %v216
        %v542 = vmul.u32 %v538, 2654435761
        %v543 = vmul.u32 %v539, 2654435761
        %v544 = vmul.u32 %v540, 2654435761
        %v545 = vmul.u32 %v541, 2654435761
        %v546 = vxor.u32 %v526, %v542
        %v547 = vxor.u32 %v527, %v543
        %v548 = vxor.u32 %v528, %v544
        %v549 = vxor.u32 %v529, %v545
        %v550 = vperm.slane %v516, 2
        %v551 = vperm.slane %v516, 6
        %v552 = vperm.slane %v517, 2
        %v553 = vperm.slane %v517, 6
        %v554 = vperm.slane %v550, 2
        %v555 = vperm.slane %v551, 2
        %v556 = vperm.slane %v552, 2
        %v557 = vperm.slane %v553, 2
        %v558 = vadd.s32 %v554, %v217
        %v559 = vadd.s32 %v555, %v217
        %v560 = vadd.s32 %v556, %v217
        %v561 = vadd.s32 %v557, %v217
        %v562 = vmul.u32 %v558, 805459861
        %v563 = vmul.u32 %v559, 805459861
        %v564 = vmul.u32 %v560, 805459861
        %v565 = vmul.u32 %v561, 805459861
        %v566 = vxor.u32 %v546, %v562
        %v567 = vxor.u32 %v547, %v563
        %v568 = vxor.u32 %v548, %v564
        %v569 = vxor.u32 %v549, %v565
        %v570 = vand.u32 %v566, 16383
        %v571 = vand.u32 %v567, 16383
        %v572 = vand.u32 %v568, 16383
        %v573 = vand.u32 %v569, 16383
        %574 = vst [vmem:[%s188 + $0x60] sm:$0xff] %v570
        %575 = vst [vmem:[%s188 + $0x68] sm:$0xff] %v571
        %576 = vst [vmem:[%s188 + $0x70] sm:$0xff] %v572
        %577 = vst [vmem:[%s188 + $0x78] sm:$0xff] %v573
        %v579 = vunpack.c.l.s4 1985246804
        %v580 = vunpack.c.0.s8 %v579
        %v581 = vperm.slane %v402, %v580
        %v583 = vrcp.pop %v581
        %v584 = vmul.f32 %v581, %v583
        %v585 = vsub.f32 1.0, %v584
        %v586 = vmul.f32 %v583, %v585
        %v587 = vadd.f32 %v583, %v586
        %vm588 = vweird.f32 %v581
        %vm589 = vweird.f32 %v583
        %vm590 = vmor %vm588, %vm589
        %v591 = vsel %vm590, %v583, %v587
        %v592 = vand.u32 2147483647, %v581
        %vm593 = vcmp.eq.f32.partialorder %v592, 8.507059e+37
        %v594 = vand.u32 %v581, 2147483648
        %v595 = vor.u32 1.1754944e-38, %v594
        %v596 = vsel %vm593, %v595, %v591
        %v597 = vmul.f32 %v209, %v596
        %v598 = vmul.f32 %v210, %v596
        %v599 = vfloor.f32 %v597
        %v600 = vfloor.f32 %v598
        %v601 = vcvt.f32.s32.to.zero.pseudo %v599
        %v602 = vcvt.f32.s32.to.zero.pseudo %v600
        %v603 = vperm.slane %v601, 0
        %v604 = vperm.slane %v601, 4
        %v605 = vperm.slane %v602, 0
        %v606 = vperm.slane %v602, 4
        %v607 = vperm.slane %v603, 0
        %v608 = vperm.slane %v604, 0
        %v609 = vperm.slane %v605, 0
        %v610 = vperm.slane %v606, 0
        %v611 = vadd.s32 %v607, %v214
        %v612 = vadd.s32 %v608, %v214
        %v613 = vadd.s32 %v609, %v214
        %v614 = vadd.s32 %v610, %v214
        %v615 = vperm.slane %v601, 1
        %v616 = vperm.slane %v601, 5
        %v617 = vperm.slane %v602, 1
        %v618 = vperm.slane %v602, 5
        %v619 = vperm.slane %v615, 1
        %v620 = vperm.slane %v616, 1
        %v621 = vperm.slane %v617, 1
        %v622 = vperm.slane %v618, 1
        %v623 = vadd.s32 %v619, %v216
        %v624 = vadd.s32 %v620, %v216
        %v625 = vadd.s32 %v621, %v216
        %v626 = vadd.s32 %v622, %v216
        %v627 = vmul.u32 %v623, 2654435761
        %v628 = vmul.u32 %v624, 2654435761
        %v629 = vmul.u32 %v625, 2654435761
        %v630 = vmul.u32 %v626, 2654435761
        %v631 = vxor.u32 %v611, %v627
        %v632 = vxor.u32 %v612, %v628
        %v633 = vxor.u32 %v613, %v629
        %v634 = vxor.u32 %v614, %v630
        %v635 = vperm.slane %v601, 2
        %v636 = vperm.slane %v601, 6
        %v637 = vperm.slane %v602, 2
        %v638 = vperm.slane %v602, 6
        %v639 = vperm.slane %v635, 2
        %v640 = vperm.slane %v636, 2
        %v641 = vperm.slane %v637, 2
        %v642 = vperm.slane %v638, 2
        %v643 = vadd.s32 %v639, %v217
        %v644 = vadd.s32 %v640, %v217
        %v645 = vadd.s32 %v641, %v217
        %v646 = vadd.s32 %v642, %v217
        %v647 = vmul.u32 %v643, 805459861
        %v648 = vmul.u32 %v644, 805459861
        %v649 = vmul.u32 %v645, 805459861
        %v650 = vmul.u32 %v646, 805459861
        %v651 = vxor.u32 %v631, %v647
        %v652 = vxor.u32 %v632, %v648
        %v653 = vxor.u32 %v633, %v649
        %v654 = vxor.u32 %v634, %v650
        %v655 = vand.u32 %v651, 16383
        %v656 = vand.u32 %v652, 16383
        %v657 = vand.u32 %v653, 16383
        %v658 = vand.u32 %v654, 16383
        %659 = vst [vmem:[%s188 + $0x80] sm:$0xff] %v655
        %660 = vst [vmem:[%s188 + $0x88] sm:$0xff] %v656
        %661 = vst [vmem:[%s188 + $0x90] sm:$0xff] %v657
        %662 = vst [vmem:[%s188 + $0x98] sm:$0xff] %v658
        %664 = vset.pattern.permute.xlu0 0
        %665 = vperm.xlu0 %664, %v196
        %v666 = vpop.permute.xlu0 %665
        %v668 = vunpack.c.l.s4 839922192
        %v669 = vunpack.c.0.s8 %v668
        %v670 = vperm.slane %v666, %v669
        %v671 = vrot.slane %v581, 7
        %v672 = vrot.slane %v671, 4
        %v673 = vrot.slane %v670, 7
        %v674 = vsel %vm313, %v672, %v673
        %v676 = vrcp.pop %v674
        %v677 = vmul.f32 %v674, %v676
        %v678 = vsub.f32 1.0, %v677
        %v679 = vmul.f32 %v676, %v678
        %v680 = vadd.f32 %v676, %v679
        %vm681 = vweird.f32 %v674
        %vm682 = vweird.f32 %v676
        %vm683 = vmor %vm681, %vm682
        %v684 = vsel %vm683, %v676, %v680
        %v685 = vand.u32 2147483647, %v674
        %vm686 = vcmp.eq.f32.partialorder %v685, 8.507059e+37
        %v687 = vand.u32 %v674, 2147483648
        %v688 = vor.u32 1.1754944e-38, %v687
        %v689 = vsel %vm686, %v688, %v684
        %v690 = vmul.f32 %v209, %v689
        %v691 = vmul.f32 %v210, %v689
        %v692 = vfloor.f32 %v690
        %v693 = vfloor.f32 %v691
        %v694 = vcvt.f32.s32.to.zero.pseudo %v692
        %v695 = vcvt.f32.s32.to.zero.pseudo %v693
        %v696 = vperm.slane %v694, 0
        %v697 = vperm.slane %v694, 4
        %v698 = vperm.slane %v695, 0
        %v699 = vperm.slane %v695, 4
        %v700 = vperm.slane %v696, 0
        %v701 = vperm.slane %v697, 0
        %v702 = vperm.slane %v698, 0
        %v703 = vperm.slane %v699, 0
        %v704 = vadd.s32 %v700, %v214
        %v705 = vadd.s32 %v701, %v214
        %v706 = vadd.s32 %v702, %v214
        %v707 = vadd.s32 %v703, %v214
        %v708 = vperm.slane %v694, 1
        %v709 = vperm.slane %v694, 5
        %v710 = vperm.slane %v695, 1
        %v711 = vperm.slane %v695, 5
        %v712 = vperm.slane %v708, 1
        %v713 = vperm.slane %v709, 1
        %v714 = vperm.slane %v710, 1
        %v715 = vperm.slane %v711, 1
        %v716 = vadd.s32 %v712, %v216
        %v717 = vadd.s32 %v713, %v216
        %v718 = vadd.s32 %v714, %v216
        %v719 = vadd.s32 %v715, %v216
        %v720 = vmul.u32 %v716, 2654435761
        %v721 = vmul.u32 %v717, 2654435761
        %v722 = vmul.u32 %v718, 2654435761
        %v723 = vmul.u32 %v719, 2654435761
        %v724 = vxor.u32 %v704, %v720
        %v725 = vxor.u32 %v705, %v721
        %v726 = vxor.u32 %v706, %v722
        %v727 = vxor.u32 %v707, %v723
        %v728 = vperm.slane %v694, 2
        %v729 = vperm.slane %v694, 6
        %v730 = vperm.slane %v695, 2
        %v731 = vperm.slane %v695, 6
        %v732 = vperm.slane %v728, 2
        %v733 = vperm.slane %v729, 2
        %v734 = vperm.slane %v730, 2
        %v735 = vperm.slane %v731, 2
        %v736 = vadd.s32 %v732, %v217
        %v737 = vadd.s32 %v733, %v217
        %v738 = vadd.s32 %v734, %v217
        %v739 = vadd.s32 %v735, %v217
        %v740 = vmul.u32 %v736, 805459861
        %v741 = vmul.u32 %v737, 805459861
        %v742 = vmul.u32 %v738, 805459861
        %v743 = vmul.u32 %v739, 805459861
        %v744 = vxor.u32 %v724, %v740
        %v745 = vxor.u32 %v725, %v741
        %v746 = vxor.u32 %v726, %v742
        %v747 = vxor.u32 %v727, %v743
        %v748 = vand.u32 %v744, 16383
        %v749 = vand.u32 %v745, 16383
        %v750 = vand.u32 %v746, 16383
        %v751 = vand.u32 %v747, 16383
        %752 = vst [vmem:[%s188 + $0xa0] sm:$0xff] %v748
        %753 = vst [vmem:[%s188 + $0xa8] sm:$0xff] %v749
        %754 = vst [vmem:[%s188 + $0xb0] sm:$0xff] %v750
        %755 = vst [vmem:[%s188 + $0xb8] sm:$0xff] %v751
        %v757 = vunpack.c.l.s4 1985246804
        %v758 = vunpack.c.0.s8 %v757
        %v759 = vperm.slane %v666, %v758
        %v760 = vrot.slane %v670, 6
        %v761 = vrot.slane %v760, 4
        %v762 = vrot.slane %v759, 6
        %v763 = vsel %vm409, %v761, %v762
        %v765 = vrcp.pop %v763
        %v766 = vmul.f32 %v763, %v765
        %v767 = vsub.f32 1.0, %v766
        %v768 = vmul.f32 %v765, %v767
        %v769 = vadd.f32 %v765, %v768
        %vm770 = vweird.f32 %v763
        %vm771 = vweird.f32 %v765
        %vm772 = vmor %vm770, %vm771
        %v773 = vsel %vm772, %v765, %v769
        %v774 = vand.u32 2147483647, %v763
        %vm775 = vcmp.eq.f32.partialorder %v774, 8.507059e+37
        %v776 = vand.u32 %v763, 2147483648
        %v777 = vor.u32 1.1754944e-38, %v776
        %v778 = vsel %vm775, %v777, %v773
        %v779 = vmul.f32 %v209, %v778
        %v780 = vmul.f32 %v210, %v778
        %v781 = vfloor.f32 %v779
        %v782 = vfloor.f32 %v780
        %v783 = vcvt.f32.s32.to.zero.pseudo %v781
        %v784 = vcvt.f32.s32.to.zero.pseudo %v782
        %v785 = vperm.slane %v783, 0
        %v786 = vperm.slane %v783, 4
        %v787 = vperm.slane %v784, 0
        %v788 = vperm.slane %v784, 4
        %v789 = vperm.slane %v785, 0
        %v790 = vperm.slane %v786, 0
        %v791 = vperm.slane %v787, 0
        %v792 = vperm.slane %v788, 0
        %v793 = vadd.s32 %v789, %v214
        %v794 = vadd.s32 %v790, %v214
        %v795 = vadd.s32 %v791, %v214
        %v796 = vadd.s32 %v792, %v214
        %v797 = vperm.slane %v783, 1
        %v798 = vperm.slane %v783, 5
        %v799 = vperm.slane %v784, 1
        %v800 = vperm.slane %v784, 5
        %v801 = vperm.slane %v797, 1
        %v802 = vperm.slane %v798, 1
        %v803 = vperm.slane %v799, 1
        %v804 = vperm.slane %v800, 1
        %v805 = vadd.s32 %v801, %v216
        %v806 = vadd.s32 %v802, %v216
        %v807 = vadd.s32 %v803, %v216
        %v808 = vadd.s32 %v804, %v216
        %v809 = vmul.u32 %v805, 2654435761
        %v810 = vmul.u32 %v806, 2654435761
        %v811 = vmul.u32 %v807, 2654435761
        %v812 = vmul.u32 %v808, 2654435761
        %v813 = vxor.u32 %v793, %v809
        %v814 = vxor.u32 %v794, %v810
        %v815 = vxor.u32 %v795, %v811
        %v816 = vxor.u32 %v796, %v812
        %v817 = vperm.slane %v783, 2
        %v818 = vperm.slane %v783, 6
        %v819 = vperm.slane %v784, 2
        %v820 = vperm.slane %v784, 6
        %v821 = vperm.slane %v817, 2
        %v822 = vperm.slane %v818, 2
        %v823 = vperm.slane %v819, 2
        %v824 = vperm.slane %v820, 2
        %v825 = vadd.s32 %v821, %v217
        %v826 = vadd.s32 %v822, %v217
        %v827 = vadd.s32 %v823, %v217
        %v828 = vadd.s32 %v824, %v217
        %v829 = vmul.u32 %v825, 805459861
        %v830 = vmul.u32 %v826, 805459861
        %v831 = vmul.u32 %v827, 805459861
        %v832 = vmul.u32 %v828, 805459861
        %v833 = vxor.u32 %v813, %v829
        %v834 = vxor.u32 %v814, %v830
        %v835 = vxor.u32 %v815, %v831
        %v836 = vxor.u32 %v816, %v832
        %v837 = vand.u32 %v833, 16383
        %v838 = vand.u32 %v834, 16383
        %v839 = vand.u32 %v835, 16383
        %v840 = vand.u32 %v836, 16383
        %841 = vst [vmem:[%s188 + $0xc0] sm:$0xff] %v837
        %842 = vst [vmem:[%s188 + $0xc8] sm:$0xff] %v838
        %843 = vst [vmem:[%s188 + $0xd0] sm:$0xff] %v839
        %844 = vst [vmem:[%s188 + $0xd8] sm:$0xff] %v840
        %v845 = vrot.slane %v759, 5
        %v846 = vrot.slane %v845, 4
        %v848 = vrcp.pop %v846
        %v849 = vmul.f32 %v846, %v848
        %v850 = vsub.f32 1.0, %v849
        %v851 = vmul.f32 %v848, %v850
        %v852 = vadd.f32 %v848, %v851
        %vm853 = vweird.f32 %v846
        %vm854 = vweird.f32 %v848
        %vm855 = vmor %vm853, %vm854
        %v856 = vsel %vm855, %v848, %v852
        %v857 = vand.u32 2147483647, %v846
        %vm858 = vcmp.eq.f32.partialorder %v857, 8.507059e+37
        %v859 = vand.u32 %v846, 2147483648
        %v860 = vor.u32 1.1754944e-38, %v859
        %v861 = vsel %vm858, %v860, %v856
        %v862 = vmul.f32 %v209, %v861
        %v863 = vmul.f32 %v210, %v861
        %v864 = vfloor.f32 %v862
        %v865 = vfloor.f32 %v863
        %v866 = vcvt.f32.s32.to.zero.pseudo %v864
        %v867 = vcvt.f32.s32.to.zero.pseudo %v865
        %v868 = vperm.slane %v866, 0
        %v869 = vperm.slane %v866, 4
        %v870 = vperm.slane %v867, 0
        %v871 = vperm.slane %v867, 4
        %v872 = vperm.slane %v868, 0
        %v873 = vperm.slane %v869, 0
        %v874 = vperm.slane %v870, 0
        %v875 = vperm.slane %v871, 0
        %v876 = vadd.s32 %v872, %v214
        %v877 = vadd.s32 %v873, %v214
        %v878 = vadd.s32 %v874, %v214
        %v879 = vadd.s32 %v875, %v214
        %v880 = vperm.slane %v866, 1
        %v881 = vperm.slane %v866, 5
        %v882 = vperm.slane %v867, 1
        %v883 = vperm.slane %v867, 5
        %v884 = vperm.slane %v880, 1
        %v885 = vperm.slane %v881, 1
        %v886 = vperm.slane %v882, 1
        %v887 = vperm.slane %v883, 1
        %v888 = vadd.s32 %v884, %v216
        %v889 = vadd.s32 %v885, %v216
        %v890 = vadd.s32 %v886, %v216
        %v891 = vadd.s32 %v887, %v216
        %v892 = vmul.u32 %v888, 2654435761
        %v893 = vmul.u32 %v889, 2654435761
        %v894 = vmul.u32 %v890, 2654435761
        %v895 = vmul.u32 %v891, 2654435761
        %v896 = vxor.u32 %v876, %v892
        %v897 = vxor.u32 %v877, %v893
        %v898 = vxor.u32 %v878, %v894
        %v899 = vxor.u32 %v879, %v895
        %v900 = vperm.slane %v866, 2
        %v901 = vperm.slane %v866, 6
        %v902 = vperm.slane %v867, 2
        %v903 = vperm.slane %v867, 6
        %v904 = vperm.slane %v900, 2
        %v905 = vperm.slane %v901, 2
        %v906 = vperm.slane %v902, 2
        %v907 = vperm.slane %v903, 2
        %v908 = vadd.s32 %v904, %v217
        %v909 = vadd.s32 %v905, %v217
        %v910 = vadd.s32 %v906, %v217
        %v911 = vadd.s32 %v907, %v217
        %v912 = vmul.u32 %v908, 805459861
        %v913 = vmul.u32 %v909, 805459861
        %v914 = vmul.u32 %v910, 805459861
        %v915 = vmul.u32 %v911, 805459861
        %v916 = vxor.u32 %v896, %v912
        %v917 = vxor.u32 %v897, %v913
        %v918 = vxor.u32 %v898, %v914
        %v919 = vxor.u32 %v899, %v915
        %v920 = vand.u32 %v916, 16383
        %v921 = vand.u32 %v917, 16383
        %v922 = vand.u32 %v918, 16383
        %v923 = vand.u32 %v919, 16383
        %924 = vst [vmem:[%s188 + $0xe0] sm:$0xff] %v920
        %925 = vst [vmem:[%s188 + $0xe8] sm:$0xff] %v921
        %926 = vst [vmem:[%s188 + $0xf0] sm:$0xff] %v922
        %927 = vst [vmem:[%s188 + $0xf8] sm:$0xff] %v923
        %929 = vset.pattern.permute.xlu0 0
        %930 = vperm.xlu0 %929, %v197
        %v931 = vpop.permute.xlu0 %930
        %v933 = vunpack.c.l.s4 839922192
        %v934 = vunpack.c.0.s8 %v933
        %v935 = vperm.slane %v931, %v934
        %v937 = vrcp.pop %v935
        %v938 = vmul.f32 %v935, %v937
        %v939 = vsub.f32 1.0, %v938
        %v940 = vmul.f32 %v937, %v939
        %v941 = vadd.f32 %v937, %v940
        %vm942 = vweird.f32 %v935
        %vm943 = vweird.f32 %v937
        %vm944 = vmor %vm942, %vm943
        %v945 = vsel %vm944, %v937, %v941
        %v946 = vand.u32 2147483647, %v935
        %vm947 = vcmp.eq.f32.partialorder %v946, 8.507059e+37
        %v948 = vand.u32 %v935, 2147483648
        %v949 = vor.u32 1.1754944e-38, %v948
        %v950 = vsel %vm947, %v949, %v945
        %v951 = vmul.f32 %v209, %v950
        %v952 = vmul.f32 %v210, %v950
        %v953 = vfloor.f32 %v951
        %v954 = vfloor.f32 %v952
        %v955 = vcvt.f32.s32.to.zero.pseudo %v953
        %v956 = vcvt.f32.s32.to.zero.pseudo %v954
        %v957 = vperm.slane %v955, 0
        %v958 = vperm.slane %v955, 4
        %v959 = vperm.slane %v956, 0
        %v960 = vperm.slane %v956, 4
        %v961 = vperm.slane %v957, 0
        %v962 = vperm.slane %v958, 0
        %v963 = vperm.slane %v959, 0
        %v964 = vperm.slane %v960, 0
        %v965 = vadd.s32 %v961, %v214
        %v966 = vadd.s32 %v962, %v214
        %v967 = vadd.s32 %v963, %v214
        %v968 = vadd.s32 %v964, %v214
        %v969 = vperm.slane %v955, 1
        %v970 = vperm.slane %v955, 5
        %v971 = vperm.slane %v956, 1
        %v972 = vperm.slane %v956, 5
        %v973 = vperm.slane %v969, 1
        %v974 = vperm.slane %v970, 1
        %v975 = vperm.slane %v971, 1
        %v976 = vperm.slane %v972, 1
        %v977 = vadd.s32 %v973, %v216
        %v978 = vadd.s32 %v974, %v216
        %v979 = vadd.s32 %v975, %v216
        %v980 = vadd.s32 %v976, %v216
        %v981 = vmul.u32 %v977, 2654435761
        %v982 = vmul.u32 %v978, 2654435761
        %v983 = vmul.u32 %v979, 2654435761
        %v984 = vmul.u32 %v980, 2654435761
        %v985 = vxor.u32 %v965, %v981
        %v986 = vxor.u32 %v966, %v982
        %v987 = vxor.u32 %v967, %v983
        %v988 = vxor.u32 %v968, %v984
        %v989 = vperm.slane %v955, 2
        %v990 = vperm.slane %v955, 6
        %v991 = vperm.slane %v956, 2
        %v992 = vperm.slane %v956, 6
        %v993 = vperm.slane %v989, 2
        %v994 = vperm.slane %v990, 2
        %v995 = vperm.slane %v991, 2
        %v996 = vperm.slane %v992, 2
        %v997 = vadd.s32 %v993, %v217
        %v998 = vadd.s32 %v994, %v217
        %v999 = vadd.s32 %v995, %v217
        %v1000 = vadd.s32 %v996, %v217
        %v1001 = vmul.u32 %v997, 805459861
        %v1002 = vmul.u32 %v998, 805459861
        %v1003 = vmul.u32 %v999, 805459861
        %v1004 = vmul.u32 %v1000, 805459861
        %v1005 = vxor.u32 %v985, %v1001
        %v1006 = vxor.u32 %v986, %v1002
        %v1007 = vxor.u32 %v987, %v1003
        %v1008 = vxor.u32 %v988, %v1004
        %v1009 = vand.u32 %v1005, 16383
        %v1010 = vand.u32 %v1006, 16383
        %v1011 = vand.u32 %v1007, 16383
        %v1012 = vand.u32 %v1008, 16383
        %1013 = vst [vmem:[%s188 + $0x100] sm:$0xff] %v1009
        %1014 = vst [vmem:[%s188 + $0x108] sm:$0xff] %v1010
        %1015 = vst [vmem:[%s188 + $0x110] sm:$0xff] %v1011
        %1016 = vst [vmem:[%s188 + $0x118] sm:$0xff] %v1012
        %v1018 = vunpack.c.l.s4 1985246804
        %v1019 = vunpack.c.0.s8 %v1018
        %v1020 = vperm.slane %v931, %v1019
        %v1021 = vrot.slane %v935, 7
        %v1022 = vrot.slane %v1021, 4
        %v1023 = vrot.slane %v1020, 7
        %v1024 = vsel %vm313, %v1022, %v1023
        %v1026 = vrcp.pop %v1024
        %v1027 = vmul.f32 %v1024, %v1026
        %v1028 = vsub.f32 1.0, %v1027
        %v1029 = vmul.f32 %v1026, %v1028
        %v1030 = vadd.f32 %v1026, %v1029
        %vm1031 = vweird.f32 %v1024
        %vm1032 = vweird.f32 %v1026
        %vm1033 = vmor %vm1031, %vm1032
        %v1034 = vsel %vm1033, %v1026, %v1030
        %v1035 = vand.u32 2147483647, %v1024
        %vm1036 = vcmp.eq.f32.partialorder %v1035, 8.507059e+37
        %v1037 = vand.u32 %v1024, 2147483648
        %v1038 = vor.u32 1.1754944e-38, %v1037
        %v1039 = vsel %vm1036, %v1038, %v1034
        %v1040 = vmul.f32 %v209, %v1039
        %v1041 = vmul.f32 %v210, %v1039
        %v1042 = vfloor.f32 %v1040
        %v1043 = vfloor.f32 %v1041
        %v1044 = vcvt.f32.s32.to.zero.pseudo %v1042
        %v1045 = vcvt.f32.s32.to.zero.pseudo %v1043
        %v1046 = vperm.slane %v1044, 0
        %v1047 = vperm.slane %v1044, 4
        %v1048 = vperm.slane %v1045, 0
        %v1049 = vperm.slane %v1045, 4
        %v1050 = vperm.slane %v1046, 0
        %v1051 = vperm.slane %v1047, 0
        %v1052 = vperm.slane %v1048, 0
        %v1053 = vperm.slane %v1049, 0
        %v1054 = vadd.s32 %v1050, %v214
        %v1055 = vadd.s32 %v1051, %v214
        %v1056 = vadd.s32 %v1052, %v214
        %v1057 = vadd.s32 %v1053, %v214
        %v1058 = vperm.slane %v1044, 1
        %v1059 = vperm.slane %v1044, 5
        %v1060 = vperm.slane %v1045, 1
        %v1061 = vperm.slane %v1045, 5
        %v1062 = vperm.slane %v1058, 1
        %v1063 = vperm.slane %v1059, 1
        %v1064 = vperm.slane %v1060, 1
        %v1065 = vperm.slane %v1061, 1
        %v1066 = vadd.s32 %v1062, %v216
        %v1067 = vadd.s32 %v1063, %v216
        %v1068 = vadd.s32 %v1064, %v216
        %v1069 = vadd.s32 %v1065, %v216
        %v1070 = vmul.u32 %v1066, 2654435761
        %v1071 = vmul.u32 %v1067, 2654435761
        %v1072 = vmul.u32 %v1068, 2654435761
        %v1073 = vmul.u32 %v1069, 2654435761
        %v1074 = vxor.u32 %v1054, %v1070
        %v1075 = vxor.u32 %v1055, %v1071
        %v1076 = vxor.u32 %v1056, %v1072
        %v1077 = vxor.u32 %v1057, %v1073
        %v1078 = vperm.slane %v1044, 2
        %v1079 = vperm.slane %v1044, 6
        %v1080 = vperm.slane %v1045, 2
        %v1081 = vperm.slane %v1045, 6
        %v1082 = vperm.slane %v1078, 2
        %v1083 = vperm.slane %v1079, 2
        %v1084 = vperm.slane %v1080, 2
        %v1085 = vperm.slane %v1081, 2
        %v1086 = vadd.s32 %v1082, %v217
        %v1087 = vadd.s32 %v1083, %v217
        %v1088 = vadd.s32 %v1084, %v217
        %v1089 = vadd.s32 %v1085, %v217
        %v1090 = vmul.u32 %v1086, 805459861
        %v1091 = vmul.u32 %v1087, 805459861
        %v1092 = vmul.u32 %v1088, 805459861
        %v1093 = vmul.u32 %v1089, 805459861
        %v1094 = vxor.u32 %v1074, %v1090
        %v1095 = vxor.u32 %v1075, %v1091
        %v1096 = vxor.u32 %v1076, %v1092
        %v1097 = vxor.u32 %v1077, %v1093
        %v1098 = vand.u32 %v1094, 16383
        %v1099 = vand.u32 %v1095, 16383
        %v1100 = vand.u32 %v1096, 16383
        %v1101 = vand.u32 %v1097, 16383
        %1102 = vst [vmem:[%s188 + $0x120] sm:$0xff] %v1098
        %1103 = vst [vmem:[%s188 + $0x128] sm:$0xff] %v1099
        %1104 = vst [vmem:[%s188 + $0x130] sm:$0xff] %v1100
        %1105 = vst [vmem:[%s188 + $0x138] sm:$0xff] %v1101
        %1107 = vset.pattern.permute.xlu0 0
        %1108 = vperm.xlu0 %1107, %v198
        %v1109 = vpop.permute.xlu0 %1108
        %v1111 = vunpack.c.l.s4 839922192
        %v1112 = vunpack.c.0.s8 %v1111
        %v1113 = vperm.slane %v1109, %v1112
        %v1114 = vrot.slane %v1020, 6
        %v1115 = vrot.slane %v1114, 4
        %v1116 = vrot.slane %v1113, 6
        %v1117 = vsel %vm409, %v1115, %v1116
        %v1119 = vrcp.pop %v1117
        %v1120 = vmul.f32 %v1117, %v1119
        %v1121 = vsub.f32 1.0, %v1120
        %v1122 = vmul.f32 %v1119, %v1121
        %v1123 = vadd.f32 %v1119, %v1122
        %vm1124 = vweird.f32 %v1117
        %vm1125 = vweird.f32 %v1119
        %vm1126 = vmor %vm1124, %vm1125
        %v1127 = vsel %vm1126, %v1119, %v1123
        %v1128 = vand.u32 2147483647, %v1117
        %vm1129 = vcmp.eq.f32.partialorder %v1128, 8.507059e+37
        %v1130 = vand.u32 %v1117, 2147483648
        %v1131 = vor.u32 1.1754944e-38, %v1130
        %v1132 = vsel %vm1129, %v1131, %v1127
        %v1133 = vmul.f32 %v209, %v1132
        %v1134 = vmul.f32 %v210, %v1132
        %v1135 = vfloor.f32 %v1133
        %v1136 = vfloor.f32 %v1134
        %v1137 = vcvt.f32.s32.to.zero.pseudo %v1135
        %v1138 = vcvt.f32.s32.to.zero.pseudo %v1136
        %v1139 = vperm.slane %v1137, 0
        %v1140 = vperm.slane %v1137, 4
        %v1141 = vperm.slane %v1138, 0
        %v1142 = vperm.slane %v1138, 4
        %v1143 = vperm.slane %v1139, 0
        %v1144 = vperm.slane %v1140, 0
        %v1145 = vperm.slane %v1141, 0
        %v1146 = vperm.slane %v1142, 0
        %v1147 = vadd.s32 %v1143, %v214
        %v1148 = vadd.s32 %v1144, %v214
        %v1149 = vadd.s32 %v1145, %v214
        %v1150 = vadd.s32 %v1146, %v214
        %v1151 = vperm.slane %v1137, 1
        %v1152 = vperm.slane %v1137, 5
        %v1153 = vperm.slane %v1138, 1
        %v1154 = vperm.slane %v1138, 5
        %v1155 = vperm.slane %v1151, 1
        %v1156 = vperm.slane %v1152, 1
        %v1157 = vperm.slane %v1153, 1
        %v1158 = vperm.slane %v1154, 1
        %v1159 = vadd.s32 %v1155, %v216
        %v1160 = vadd.s32 %v1156, %v216
        %v1161 = vadd.s32 %v1157, %v216
        %v1162 = vadd.s32 %v1158, %v216
        %v1163 = vmul.u32 %v1159, 2654435761
        %v1164 = vmul.u32 %v1160, 2654435761
        %v1165 = vmul.u32 %v1161, 2654435761
        %v1166 = vmul.u32 %v1162, 2654435761
        %v1167 = vxor.u32 %v1147, %v1163
        %v1168 = vxor.u32 %v1148, %v1164
        %v1169 = vxor.u32 %v1149, %v1165
        %v1170 = vxor.u32 %v1150, %v1166
        %v1171 = vperm.slane %v1137, 2
        %v1172 = vperm.slane %v1137, 6
        %v1173 = vperm.slane %v1138, 2
        %v1174 = vperm.slane %v1138, 6
        %v1175 = vperm.slane %v1171, 2
        %v1176 = vperm.slane %v1172, 2
        %v1177 = vperm.slane %v1173, 2
        %v1178 = vperm.slane %v1174, 2
        %v1179 = vadd.s32 %v1175, %v217
        %v1180 = vadd.s32 %v1176, %v217
        %v1181 = vadd.s32 %v1177, %v217
        %v1182 = vadd.s32 %v1178, %v217
        %v1183 = vmul.u32 %v1179, 805459861
        %v1184 = vmul.u32 %v1180, 805459861
        %v1185 = vmul.u32 %v1181, 805459861
        %v1186 = vmul.u32 %v1182, 805459861
        %v1187 = vxor.u32 %v1167, %v1183
        %v1188 = vxor.u32 %v1168, %v1184
        %v1189 = vxor.u32 %v1169, %v1185
        %v1190 = vxor.u32 %v1170, %v1186
        %v1191 = vand.u32 %v1187, 16383
        %v1192 = vand.u32 %v1188, 16383
        %v1193 = vand.u32 %v1189, 16383
        %v1194 = vand.u32 %v1190, 16383
        %1195 = vst [vmem:[%s188 + $0x140] sm:$0xff] %v1191
        %1196 = vst [vmem:[%s188 + $0x148] sm:$0xff] %v1192
        %1197 = vst [vmem:[%s188 + $0x150] sm:$0xff] %v1193
        %1198 = vst [vmem:[%s188 + $0x158] sm:$0xff] %v1194
        %v1199 = vrot.slane %v1113, 5
        %v1200 = vrot.slane %v1199, 4
        %v1202 = vrcp.pop %v1200
        %v1203 = vmul.f32 %v1200, %v1202
        %v1204 = vsub.f32 1.0, %v1203
        %v1205 = vmul.f32 %v1202, %v1204
        %v1206 = vadd.f32 %v1202, %v1205
        %vm1207 = vweird.f32 %v1200
        %vm1208 = vweird.f32 %v1202
        %vm1209 = vmor %vm1207, %vm1208
        %v1210 = vsel %vm1209, %v1202, %v1206
        %v1211 = vand.u32 2147483647, %v1200
        %vm1212 = vcmp.eq.f32.partialorder %v1211, 8.507059e+37
        %v1213 = vand.u32 %v1200, 2147483648
        %v1214 = vor.u32 1.1754944e-38, %v1213
        %v1215 = vsel %vm1212, %v1214, %v1210
        %v1216 = vmul.f32 %v209, %v1215
        %v1217 = vmul.f32 %v210, %v1215
        %v1218 = vfloor.f32 %v1216
        %v1219 = vfloor.f32 %v1217
        %v1220 = vcvt.f32.s32.to.zero.pseudo %v1218
        %v1221 = vcvt.f32.s32.to.zero.pseudo %v1219
        %v1222 = vperm.slane %v1220, 0
        %v1223 = vperm.slane %v1220, 4
        %v1224 = vperm.slane %v1221, 0
        %v1225 = vperm.slane %v1221, 4
        %v1226 = vperm.slane %v1222, 0
        %v1227 = vperm.slane %v1223, 0
        %v1228 = vperm.slane %v1224, 0
        %v1229 = vperm.slane %v1225, 0
        %v1230 = vadd.s32 %v1226, %v214
        %v1231 = vadd.s32 %v1227, %v214
        %v1232 = vadd.s32 %v1228, %v214
        %v1233 = vadd.s32 %v1229, %v214
        %v1234 = vperm.slane %v1220, 1
        %v1235 = vperm.slane %v1220, 5
        %v1236 = vperm.slane %v1221, 1
        %v1237 = vperm.slane %v1221, 5
        %v1238 = vperm.slane %v1234, 1
        %v1239 = vperm.slane %v1235, 1
        %v1240 = vperm.slane %v1236, 1
        %v1241 = vperm.slane %v1237, 1
        %v1242 = vadd.s32 %v1238, %v216
        %v1243 = vadd.s32 %v1239, %v216
        %v1244 = vadd.s32 %v1240, %v216
        %v1245 = vadd.s32 %v1241, %v216
        %v1246 = vmul.u32 %v1242, 2654435761
        %v1247 = vmul.u32 %v1243, 2654435761
        %v1248 = vmul.u32 %v1244, 2654435761
        %v1249 = vmul.u32 %v1245, 2654435761
        %v1250 = vxor.u32 %v1230, %v1246
        %v1251 = vxor.u32 %v1231, %v1247
        %v1252 = vxor.u32 %v1232, %v1248
        %v1253 = vxor.u32 %v1233, %v1249
        %v1254 = vperm.slane %v1220, 2
        %v1255 = vperm.slane %v1220, 6
        %v1256 = vperm.slane %v1221, 2
        %v1257 = vperm.slane %v1221, 6
        %v1258 = vperm.slane %v1254, 2
        %v1259 = vperm.slane %v1255, 2
        %v1260 = vperm.slane %v1256, 2
        %v1261 = vperm.slane %v1257, 2
        %v1262 = vadd.s32 %v1258, %v217
        %v1263 = vadd.s32 %v1259, %v217
        %v1264 = vadd.s32 %v1260, %v217
        %v1265 = vadd.s32 %v1261, %v217
        %v1266 = vmul.u32 %v1262, 805459861
        %v1267 = vmul.u32 %v1263, 805459861
        %v1268 = vmul.u32 %v1264, 805459861
        %v1269 = vmul.u32 %v1265, 805459861
        %v1270 = vxor.u32 %v1250, %v1266
        %v1271 = vxor.u32 %v1251, %v1267
        %v1272 = vxor.u32 %v1252, %v1268
        %v1273 = vxor.u32 %v1253, %v1269
        %v1274 = vand.u32 %v1270, 16383
        %v1275 = vand.u32 %v1271, 16383
        %v1276 = vand.u32 %v1272, 16383
        %v1277 = vand.u32 %v1273, 16383
        %1278 = vst [vmem:[%s188 + $0x160] sm:$0xff] %v1274
        %1279 = vst [vmem:[%s188 + $0x168] sm:$0xff] %v1275
        %1280 = vst [vmem:[%s188 + $0x170] sm:$0xff] %v1276
        %1281 = vst [vmem:[%s188 + $0x178] sm:$0xff] %v1277
        %v1283 = vunpack.c.l.s4 1985246804
        %v1284 = vunpack.c.0.s8 %v1283
        %v1285 = vperm.slane %v1109, %v1284
        %v1287 = vrcp.pop %v1285
        %v1288 = vmul.f32 %v1285, %v1287
        %v1289 = vsub.f32 1.0, %v1288
        %v1290 = vmul.f32 %v1287, %v1289
        %v1291 = vadd.f32 %v1287, %v1290
        %vm1292 = vweird.f32 %v1285
        %vm1293 = vweird.f32 %v1287
        %vm1294 = vmor %vm1292, %vm1293
        %v1295 = vsel %vm1294, %v1287, %v1291
        %v1296 = vand.u32 2147483647, %v1285
        %vm1297 = vcmp.eq.f32.partialorder %v1296, 8.507059e+37
        %v1298 = vand.u32 %v1285, 2147483648
        %v1299 = vor.u32 1.1754944e-38, %v1298
        %v1300 = vsel %vm1297, %v1299, %v1295
        %v1301 = vmul.f32 %v209, %v1300
        %v1302 = vmul.f32 %v210, %v1300
        %v1303 = vfloor.f32 %v1301
        %v1304 = vfloor.f32 %v1302
        %v1305 = vcvt.f32.s32.to.zero.pseudo %v1303
        %v1306 = vcvt.f32.s32.to.zero.pseudo %v1304
        %v1307 = vperm.slane %v1305, 0
        %v1308 = vperm.slane %v1305, 4
        %v1309 = vperm.slane %v1306, 0
        %v1310 = vperm.slane %v1306, 4
        %v1311 = vperm.slane %v1307, 0
        %v1312 = vperm.slane %v1308, 0
        %v1313 = vperm.slane %v1309, 0
        %v1314 = vperm.slane %v1310, 0
        %v1315 = vadd.s32 %v1311, %v214
        %v1316 = vadd.s32 %v1312, %v214
        %v1317 = vadd.s32 %v1313, %v214
        %v1318 = vadd.s32 %v1314, %v214
        %v1319 = vperm.slane %v1305, 1
        %v1320 = vperm.slane %v1305, 5
        %v1321 = vperm.slane %v1306, 1
        %v1322 = vperm.slane %v1306, 5
        %v1323 = vperm.slane %v1319, 1
        %v1324 = vperm.slane %v1320, 1
        %v1325 = vperm.slane %v1321, 1
        %v1326 = vperm.slane %v1322, 1
        %v1327 = vadd.s32 %v1323, %v216
        %v1328 = vadd.s32 %v1324, %v216
        %v1329 = vadd.s32 %v1325, %v216
        %v1330 = vadd.s32 %v1326, %v216
        %v1331 = vmul.u32 %v1327, 2654435761
        %v1332 = vmul.u32 %v1328, 2654435761
        %v1333 = vmul.u32 %v1329, 2654435761
        %v1334 = vmul.u32 %v1330, 2654435761
        %v1335 = vxor.u32 %v1315, %v1331
        %v1336 = vxor.u32 %v1316, %v1332
        %v1337 = vxor.u32 %v1317, %v1333
        %v1338 = vxor.u32 %v1318, %v1334
        %v1339 = vperm.slane %v1305, 2
        %v1340 = vperm.slane %v1305, 6
        %v1341 = vperm.slane %v1306, 2
        %v1342 = vperm.slane %v1306, 6
        %v1343 = vperm.slane %v1339, 2
        %v1344 = vperm.slane %v1340, 2
        %v1345 = vperm.slane %v1341, 2
        %v1346 = vperm.slane %v1342, 2
        %v1347 = vadd.s32 %v1343, %v217
        %v1348 = vadd.s32 %v1344, %v217
        %v1349 = vadd.s32 %v1345, %v217
        %v1350 = vadd.s32 %v1346, %v217
        %v1351 = vmul.u32 %v1347, 805459861
        %v1352 = vmul.u32 %v1348, 805459861
        %v1353 = vmul.u32 %v1349, 805459861
        %v1354 = vmul.u32 %v1350, 805459861
        %v1355 = vxor.u32 %v1335, %v1351
        %v1356 = vxor.u32 %v1336, %v1352
        %v1357 = vxor.u32 %v1337, %v1353
        %v1358 = vxor.u32 %v1338, %v1354
        %v1359 = vand.u32 %v1355, 16383
        %v1360 = vand.u32 %v1356, 16383
        %v1361 = vand.u32 %v1357, 16383
        %v1362 = vand.u32 %v1358, 16383
        %1363 = vst [vmem:[%s188 + $0x180] sm:$0xff] %v1359
        %1364 = vst [vmem:[%s188 + $0x188] sm:$0xff] %v1360
        %1365 = vst [vmem:[%s188 + $0x190] sm:$0xff] %v1361
        %1366 = vst [vmem:[%s188 + $0x198] sm:$0xff] %v1362
        %1368 = vset.pattern.permute.xlu0 0
        %1369 = vperm.xlu0 %1368, %v199
        %v1370 = vpop.permute.xlu0 %1369
        %v1372 = vunpack.c.l.s4 839922192
        %v1373 = vunpack.c.0.s8 %v1372
        %v1374 = vperm.slane %v1370, %v1373
        %v1375 = vrot.slane %v1285, 7
        %v1376 = vrot.slane %v1375, 4
        %v1377 = vrot.slane %v1374, 7
        %v1378 = vsel %vm313, %v1376, %v1377
        %v1380 = vrcp.pop %v1378
        %v1381 = vmul.f32 %v1378, %v1380
        %v1382 = vsub.f32 1.0, %v1381
        %v1383 = vmul.f32 %v1380, %v1382
        %v1384 = vadd.f32 %v1380, %v1383
        %vm1385 = vweird.f32 %v1378
        %vm1386 = vweird.f32 %v1380
        %vm1387 = vmor %vm1385, %vm1386
        %v1388 = vsel %vm1387, %v1380, %v1384
        %v1389 = vand.u32 2147483647, %v1378
        %vm1390 = vcmp.eq.f32.partialorder %v1389, 8.507059e+37
        %v1391 = vand.u32 %v1378, 2147483648
        %v1392 = vor.u32 1.1754944e-38, %v1391
        %v1393 = vsel %vm1390, %v1392, %v1388
        %v1394 = vmul.f32 %v209, %v1393
        %v1395 = vmul.f32 %v210, %v1393
        %v1396 = vfloor.f32 %v1394
        %v1397 = vfloor.f32 %v1395
        %v1398 = vcvt.f32.s32.to.zero.pseudo %v1396
        %v1399 = vcvt.f32.s32.to.zero.pseudo %v1397
        %v1400 = vperm.slane %v1398, 0
        %v1401 = vperm.slane %v1398, 4
        %v1402 = vperm.slane %v1399, 0
        %v1403 = vperm.slane %v1399, 4
        %v1404 = vperm.slane %v1400, 0
        %v1405 = vperm.slane %v1401, 0
        %v1406 = vperm.slane %v1402, 0
        %v1407 = vperm.slane %v1403, 0
        %v1408 = vadd.s32 %v1404, %v214
        %v1409 = vadd.s32 %v1405, %v214
        %v1410 = vadd.s32 %v1406, %v214
        %v1411 = vadd.s32 %v1407, %v214
        %v1412 = vperm.slane %v1398, 1
        %v1413 = vperm.slane %v1398, 5
        %v1414 = vperm.slane %v1399, 1
        %v1415 = vperm.slane %v1399, 5
        %v1416 = vperm.slane %v1412, 1
        %v1417 = vperm.slane %v1413, 1
        %v1418 = vperm.slane %v1414, 1
        %v1419 = vperm.slane %v1415, 1
        %v1420 = vadd.s32 %v1416, %v216
        %v1421 = vadd.s32 %v1417, %v216
        %v1422 = vadd.s32 %v1418, %v216
        %v1423 = vadd.s32 %v1419, %v216
        %v1424 = vmul.u32 %v1420, 2654435761
        %v1425 = vmul.u32 %v1421, 2654435761
        %v1426 = vmul.u32 %v1422, 2654435761
        %v1427 = vmul.u32 %v1423, 2654435761
        %v1428 = vxor.u32 %v1408, %v1424
        %v1429 = vxor.u32 %v1409, %v1425
        %v1430 = vxor.u32 %v1410, %v1426
        %v1431 = vxor.u32 %v1411, %v1427
        %v1432 = vperm.slane %v1398, 2
        %v1433 = vperm.slane %v1398, 6
        %v1434 = vperm.slane %v1399, 2
        %v1435 = vperm.slane %v1399, 6
        %v1436 = vperm.slane %v1432, 2
        %v1437 = vperm.slane %v1433, 2
        %v1438 = vperm.slane %v1434, 2
        %v1439 = vperm.slane %v1435, 2
        %v1440 = vadd.s32 %v1436, %v217
        %v1441 = vadd.s32 %v1437, %v217
        %v1442 = vadd.s32 %v1438, %v217
        %v1443 = vadd.s32 %v1439, %v217
        %v1444 = vmul.u32 %v1440, 805459861
        %v1445 = vmul.u32 %v1441, 805459861
        %v1446 = vmul.u32 %v1442, 805459861
        %v1447 = vmul.u32 %v1443, 805459861
        %v1448 = vxor.u32 %v1428, %v1444
        %v1449 = vxor.u32 %v1429, %v1445
        %v1450 = vxor.u32 %v1430, %v1446
        %v1451 = vxor.u32 %v1431, %v1447
        %v1452 = vand.u32 %v1448, 16383
        %v1453 = vand.u32 %v1449, 16383
        %v1454 = vand.u32 %v1450, 16383
        %v1455 = vand.u32 %v1451, 16383
        %1456 = vst [vmem:[%s188 + $0x1a0] sm:$0xff] %v1452
        %1457 = vst [vmem:[%s188 + $0x1a8] sm:$0xff] %v1453
        %1458 = vst [vmem:[%s188 + $0x1b0] sm:$0xff] %v1454
        %1459 = vst [vmem:[%s188 + $0x1b8] sm:$0xff] %v1455
        %v1461 = vunpack.c.l.s4 1985246804
        %v1462 = vunpack.c.0.s8 %v1461
        %v1463 = vperm.slane %v1370, %v1462
        %v1464 = vrot.slane %v1374, 6
        %v1465 = vrot.slane %v1464, 4
        %v1466 = vrot.slane %v1463, 6
        %v1467 = vsel %vm409, %v1465, %v1466
        %v1469 = vrcp.pop %v1467
        %v1470 = vmul.f32 %v1467, %v1469
        %v1471 = vsub.f32 1.0, %v1470
        %v1472 = vmul.f32 %v1469, %v1471
        %v1473 = vadd.f32 %v1469, %v1472
        %vm1474 = vweird.f32 %v1467
        %vm1475 = vweird.f32 %v1469
        %vm1476 = vmor %vm1474, %vm1475
        %v1477 = vsel %vm1476, %v1469, %v1473
        %v1478 = vand.u32 2147483647, %v1467
        %vm1479 = vcmp.eq.f32.partialorder %v1478, 8.507059e+37
        %v1480 = vand.u32 %v1467, 2147483648
        %v1481 = vor.u32 1.1754944e-38, %v1480
        %v1482 = vsel %vm1479, %v1481, %v1477
        %v1483 = vmul.f32 %v209, %v1482
        %v1484 = vmul.f32 %v210, %v1482
        %v1485 = vfloor.f32 %v1483
        %v1486 = vfloor.f32 %v1484
        %v1487 = vcvt.f32.s32.to.zero.pseudo %v1485
        %v1488 = vcvt.f32.s32.to.zero.pseudo %v1486
        %v1489 = vperm.slane %v1487, 0
        %v1490 = vperm.slane %v1487, 4
        %v1491 = vperm.slane %v1488, 0
        %v1492 = vperm.slane %v1488, 4
        %v1493 = vperm.slane %v1489, 0
        %v1494 = vperm.slane %v1490, 0
        %v1495 = vperm.slane %v1491, 0
        %v1496 = vperm.slane %v1492, 0
        %v1497 = vadd.s32 %v1493, %v214
        %v1498 = vadd.s32 %v1494, %v214
        %v1499 = vadd.s32 %v1495, %v214
        %v1500 = vadd.s32 %v1496, %v214
        %v1501 = vperm.slane %v1487, 1
        %v1502 = vperm.slane %v1487, 5
        %v1503 = vperm.slane %v1488, 1
        %v1504 = vperm.slane %v1488, 5
        %v1505 = vperm.slane %v1501, 1
        %v1506 = vperm.slane %v1502, 1
        %v1507 = vperm.slane %v1503, 1
        %v1508 = vperm.slane %v1504, 1
        %v1509 = vadd.s32 %v1505, %v216
        %v1510 = vadd.s32 %v1506, %v216
        %v1511 = vadd.s32 %v1507, %v216
        %v1512 = vadd.s32 %v1508, %v216
        %v1513 = vmul.u32 %v1509, 2654435761
        %v1514 = vmul.u32 %v1510, 2654435761
        %v1515 = vmul.u32 %v1511, 2654435761
        %v1516 = vmul.u32 %v1512, 2654435761
        %v1517 = vxor.u32 %v1497, %v1513
        %v1518 = vxor.u32 %v1498, %v1514
        %v1519 = vxor.u32 %v1499, %v1515
        %v1520 = vxor.u32 %v1500, %v1516
        %v1521 = vperm.slane %v1487, 2
        %v1522 = vperm.slane %v1487, 6
        %v1523 = vperm.slane %v1488, 2
        %v1524 = vperm.slane %v1488, 6
        %v1525 = vperm.slane %v1521, 2
        %v1526 = vperm.slane %v1522, 2
        %v1527 = vperm.slane %v1523, 2
        %v1528 = vperm.slane %v1524, 2
        %v1529 = vadd.s32 %v1525, %v217
        %v1530 = vadd.s32 %v1526, %v217
        %v1531 = vadd.s32 %v1527, %v217
        %v1532 = vadd.s32 %v1528, %v217
        %v1533 = vmul.u32 %v1529, 805459861
        %v1534 = vmul.u32 %v1530, 805459861
        %v1535 = vmul.u32 %v1531, 805459861
        %v1536 = vmul.u32 %v1532, 805459861
        %v1537 = vxor.u32 %v1517, %v1533
        %v1538 = vxor.u32 %v1518, %v1534
        %v1539 = vxor.u32 %v1519, %v1535
        %v1540 = vxor.u32 %v1520, %v1536
        %v1541 = vand.u32 %v1537, 16383
        %v1542 = vand.u32 %v1538, 16383
        %v1543 = vand.u32 %v1539, 16383
        %v1544 = vand.u32 %v1540, 16383
        %1545 = vst [vmem:[%s188 + $0x1c0] sm:$0xff] %v1541
        %1546 = vst [vmem:[%s188 + $0x1c8] sm:$0xff] %v1542
        %1547 = vst [vmem:[%s188 + $0x1d0] sm:$0xff] %v1543
        %1548 = vst [vmem:[%s188 + $0x1d8] sm:$0xff] %v1544
        %v1549 = vrot.slane %v1463, 5
        %v1550 = vrot.slane %v1549, 4
        %v1552 = vrcp.pop %v1550
        %v1553 = vmul.f32 %v1550, %v1552
        %v1554 = vsub.f32 1.0, %v1553
        %v1555 = vmul.f32 %v1552, %v1554
        %v1556 = vadd.f32 %v1552, %v1555
        %vm1557 = vweird.f32 %v1550
        %vm1558 = vweird.f32 %v1552
        %vm1559 = vmor %vm1557, %vm1558
        %v1560 = vsel %vm1559, %v1552, %v1556
        %v1561 = vand.u32 2147483647, %v1550
        %vm1562 = vcmp.eq.f32.partialorder %v1561, 8.507059e+37
        %v1563 = vand.u32 %v1550, 2147483648
        %v1564 = vor.u32 1.1754944e-38, %v1563
        %v1565 = vsel %vm1562, %v1564, %v1560
        %v1566 = vmul.f32 %v209, %v1565
        %v1567 = vmul.f32 %v210, %v1565
        %v1568 = vfloor.f32 %v1566
        %v1569 = vfloor.f32 %v1567
        %v1570 = vcvt.f32.s32.to.zero.pseudo %v1568
        %v1571 = vcvt.f32.s32.to.zero.pseudo %v1569
        %v1572 = vperm.slane %v1570, 0
        %v1573 = vperm.slane %v1570, 4
        %v1574 = vperm.slane %v1571, 0
        %v1575 = vperm.slane %v1571, 4
        %v1576 = vperm.slane %v1572, 0
        %v1577 = vperm.slane %v1573, 0
        %v1578 = vperm.slane %v1574, 0
        %v1579 = vperm.slane %v1575, 0
        %v1580 = vadd.s32 %v1576, %v214
        %v1581 = vadd.s32 %v1577, %v214
        %v1582 = vadd.s32 %v1578, %v214
        %v1583 = vadd.s32 %v1579, %v214
        %v1584 = vperm.slane %v1570, 1
        %v1585 = vperm.slane %v1570, 5
        %v1586 = vperm.slane %v1571, 1
        %v1587 = vperm.slane %v1571, 5
        %v1588 = vperm.slane %v1584, 1
        %v1589 = vperm.slane %v1585, 1
        %v1590 = vperm.slane %v1586, 1
        %v1591 = vperm.slane %v1587, 1
        %v1592 = vadd.s32 %v1588, %v216
        %v1593 = vadd.s32 %v1589, %v216
        %v1594 = vadd.s32 %v1590, %v216
        %v1595 = vadd.s32 %v1591, %v216
        %v1596 = vmul.u32 %v1592, 2654435761
        %v1597 = vmul.u32 %v1593, 2654435761
        %v1598 = vmul.u32 %v1594, 2654435761
        %v1599 = vmul.u32 %v1595, 2654435761
        %v1600 = vxor.u32 %v1580, %v1596
        %v1601 = vxor.u32 %v1581, %v1597
        %v1602 = vxor.u32 %v1582, %v1598
        %v1603 = vxor.u32 %v1583, %v1599
        %v1604 = vperm.slane %v1570, 2
        %v1605 = vperm.slane %v1570, 6
        %v1606 = vperm.slane %v1571, 2
        %v1607 = vperm.slane %v1571, 6
        %v1608 = vperm.slane %v1604, 2
        %v1609 = vperm.slane %v1605, 2
        %v1610 = vperm.slane %v1606, 2
        %v1611 = vperm.slane %v1607, 2
        %v1612 = vadd.s32 %v1608, %v217
        %v1613 = vadd.s32 %v1609, %v217
        %v1614 = vadd.s32 %v1610, %v217
        %v1615 = vadd.s32 %v1611, %v217
        %v1616 = vmul.u32 %v1612, 805459861
        %v1617 = vmul.u32 %v1613, 805459861
        %v1618 = vmul.u32 %v1614, 805459861
        %v1619 = vmul.u32 %v1615, 805459861
        %v1620 = vxor.u32 %v1600, %v1616
        %v1621 = vxor.u32 %v1601, %v1617
        %v1622 = vxor.u32 %v1602, %v1618
        %v1623 = vxor.u32 %v1603, %v1619
        %v1624 = vand.u32 %v1620, 16383
        %v1625 = vand.u32 %v1621, 16383
        %v1626 = vand.u32 %v1622, 16383
        %v1627 = vand.u32 %v1623, 16383
        %1628 = vst [vmem:[%s188 + $0x1e0] sm:$0xff] %v1624
        %1629 = vst [vmem:[%s188 + $0x1e8] sm:$0xff] %v1625
        %1630 = vst [vmem:[%s188 + $0x1f0] sm:$0xff] %v1626
        %1631 = vst [vmem:[%s188 + $0x1f8] sm:$0xff] %v1627
        %s1632 = sand.u32 %s96, 1
        %s1633 = scalar_lea.sflag [#allocation4], %s1632
        %s1634 = sand.u32 %s96, 1
        %s1635 = smul.addr %s1634, 512
        %s1636 = scalar_lea.vmem [#allocation5], %s1635
        // Predicated region
        $region37: #{tpu_custom_call.1} parent=31 // pred_check
          %p1637 = pneg %p106
        $region38: #{tpu_custom_call.1} parent=31 // pred_check_branch
          %1639 = sbr.rel (%p1637) target = $region40
        $region39: #{tpu_custom_call.1} parent=31 // pred_region
          %s1640 = smul.u32 4, %s20
          %1642 = vsyncadd %s1633, 0
          %s1643 = smul.addr %s1640, 8
          %s1644 = scalar_lea.hbm %s3, %s1643
          %s1645 = sshll.u32 %s1636, 4
          %s1646 = int_to_ptr.vmem [resolvable:$true] %s1645
          %s1647 = sshll.u32 %s1644, 4
          %s1648 = int_to_ptr.hbm [resolvable:$true] %s1647
          %1653 = dma.vmem_to_hbm [thread:$0]  %s1646, 8192, %s1648, %s1633, 512, 2048, 32
        $region40: #{tpu_custom_call.1} parent=31 // pred_fallthru
          _
      $region32: #{tpu_custom_call.1} parent=5 // pred_fallthru
        _
      %p1654 = scmp.le.s32.totalorder 2, %s15
      // Predicated region
      $region41: #{tpu_custom_call.1} parent=5 // pred_check
        %p1655 = pneg %p1654
      $region42: #{tpu_custom_call.1} parent=5 // pred_check_branch
        %1657 = sbr.rel (%p1655) target = $region44
      $region43: #{tpu_custom_call.1} parent=5 // pred_region
        %s1658 = ssub.s32 %s15, 2
        // Predicated region
        $region45: #{tpu_custom_call.1} parent=43 // pred_check
          %p1659 = pneg %p112
        $region46: #{tpu_custom_call.1} parent=43 // pred_check_branch
          %1661 = sbr.rel (%p1659) target = $region48
        $region47: #{tpu_custom_call.1} parent=43 // pred_region
          %s1662 = sand.u32 %s97, 1
          %s1663 = scalar_lea.sflag [#allocation4], %s1662
          %s1664 = sand.u32 %s97, 1
          %s1665 = smul.addr %s1664, 512
          %s1666 = scalar_lea.vmem [#allocation5], %s1665
          %1668 = dma.done %s1663, 8192
        $region48: #{tpu_custom_call.1} parent=43 // pred_fallthru
          _
      $region44: #{tpu_custom_call.1} parent=5 // pred_fallthru
        _
    $region6: #{tpu_custom_call.1} parent=1 // loop_footer
      %s19 = sadd.s32 1, %s15
    $region7: #{tpu_custom_call.1} parent=1 // loop_footer_branch
      %14 = sbr.rel target = $region3
    $region8: #{tpu_custom_call.1} parent=1 // loop_exit
      _
    %1669 = vsyncpa [#allocation3], 1
    %s1670 = scalar_lea.sflag [#allocation3], 1
    %1671 = vsyncpa %s1670, 1
    %1672 = vsyncpa [#allocation4], 1
    %s1673 = scalar_lea.sflag [#allocation4], 1
    %1674 = vsyncpa %s1673, 1

</llo_original>
